<compile_context>
chip_gen: v7x
topology: tpu7x:2x2x1
jax: 0.10.0
libtpu: 0.0.40
codegen_flags: <defaults>
</compile_context>

<pallas_src>
import numpy as np
import jax
import jax.numpy as jnp
from jax.experimental import pallas as pl
from jax.experimental.pallas import tpu as pltpu

# Indices into each admission record (mirrors Params() in the original code).
DIAGNOSE_INDEX = 0
PROCEDURE_INDEX = 1
MEDICATION_INDEX = 2


# ----------------------------------------------------------------------------
# Pallas kernel: batched embedding-mean + input gates, fused GRU recurrence,
# batched ReLU + Linear, single lane-dense output store.
# ----------------------------------------------------------------------------
def _encoder_kernel(cnt_ref, emb_ref, wih_ref, whh_ref, bi_ref, bhn_ref,
                    wl_ref, bl_ref,
                    q_ref,
                    h_scr):
    T = cnt_ref.shape[0]
    HP2 = whh_ref.shape[0]          # 2 * HP (lane-dense carry width, multiple of 128)

    # ---- batched over T (outside the recurrence) ----
    # Block-diagonal embedding table: one matmul produces [x_d | x_p]  (T, 2D).
    x = jnp.dot(cnt_ref[...], emb_ref[...], preferred_element_type=jnp.float32)
    # One fused input projection for both GRUs and all 3 gates.
    # Column layout: [ r_d | r_p | z_d | z_p | n_d | n_p ], each block HP wide.
    # bi already contains bih (all gates) + bhh_r + bhh_z (folded).
    gates_i = (jnp.dot(x, wih_ref[...], preferred_element_type=jnp.float32)
               + bi_ref[...])                                    # (T, 3 * HP2)

    whh = whh_ref[...]              # (2*HP, 6*HP) block-diagonal fused hidden weight
    bhn = bhn_ref[...]              # (1, 2*HP)  hidden bias of the n-gate only

    h = jnp.zeros((1, HP2), jnp.float32)     # [h_d | h_p] fused carry
    for t in range(T):              # static unroll; only h-dependent work remains
        g_i = gates_i[t:t + 1, :]                                         # (1, 6*HP)
        g_h = jnp.dot(h, whh, preferred_element_type=jnp.float32)         # (1, 6*HP)
        r = jax.nn.sigmoid(g_i[:, 0:HP2] + g_h[:, 0:HP2])
        z = jax.nn.sigmoid(g_i[:, HP2:2 * HP2] + g_h[:, HP2:2 * HP2])
        n = jnp.tanh(g_i[:, 2 * HP2:3 * HP2]
                     + r * (g_h[:, 2 * HP2:3 * HP2] + bhn))
        h = (1.0 - z) * n + z * h
        h_scr[pl.ds(t, 1), :] = h                                 # dense 128-lane row

    # ---- batched ReLU + Linear(2H -> H): one matmul, one lane-dense store ----
    q_ref[...] = (jnp.dot(jnp.maximum(h_scr[...], 0.0), wl_ref[...],
                          preferred_element_type=jnp.float32)
                  + bl_ref[...])


@jax.jit
def _encoder_pallas(cnt, emb, wih, whh, bi, bhn, wl, bl):
    T = cnt.shape[0]
    HP2 = whh.shape[0]
    HQ = wl.shape[1]
    n_in = 8
    return pl.pallas_call(
        _encoder_kernel,
        out_shape=jax.ShapeDtypeStruct((T, HQ), jnp.float32),
        in_specs=[pl.BlockSpec(memory_space=pltpu.MemorySpace.VMEM)] * n_in,
        out_specs=pl.BlockSpec(memory_space=pltpu.MemorySpace.VMEM),
        scratch_shapes=[pltpu.VMEM((T, HP2), jnp.float32)],
    )(cnt, emb, wih, whh, bi, bhn, wl, bl)


# ----------------------------------------------------------------------------
# Parameter construction (deterministic, mirrors nn.Module.__init__ shapes)
# ----------------------------------------------------------------------------
def init_params(key, input_size, hidden_size, diagnoses_count, procedure_count):
    ks = jax.random.split(key, 6)
    u = lambda k, shape, b: jax.random.uniform(k, shape, jnp.float32, -b, b)
    stdv = 1.0 / np.sqrt(hidden_size)

    def gru(k):
        kk = jax.random.split(k, 4)
        # Stored pre-transposed per gate: x @ wih[g]; gate order r, z, n.
        return dict(
            wih=u(kk[0], (3, input_size, hidden_size), stdv),
            whh=u(kk[1], (3, hidden_size, hidden_size), stdv),
            bih=u(kk[2], (3, hidden_size), stdv),
            bhh=u(kk[3], (3, hidden_size), stdv),
        )

    lb = 1.0 / np.sqrt(2 * hidden_size)
    return dict(
        emb_d=u(ks[0], (diagnoses_count, input_size), 0.1),
        emb_p=u(ks[1], (procedure_count, input_size), 0.1),
        gru_d=gru(ks[2]),
        gru_p=gru(ks[3]),
        # nn.Linear(2H, H) stored pre-transposed: x @ wl + bl.
        wl=u(ks[4], (2 * hidden_size, hidden_size), lb),
        bl=u(ks[5], (hidden_size,), lb),
    )


def pack_params(params):
    """Fuse both GRUs + all gates into lane-padded block matrices for the kernel."""
    emb_d, emb_p = params["emb_d"], params["emb_p"]
    Vd, D = emb_d.shape
    Vp = emb_p.shape[0]
    H = params["wl"].shape[1]
    HP = int(pl.cdiv(2 * H, 128)) * 128 // 2     # padded per-GRU hidden (2*HP % 128 == 0)
    HQ = int(pl.cdiv(H, 128)) * 128              # padded output lane width
    gd, gp = params["gru_d"], params["gru_p"]

    # Block-diagonal embedding: (T, Vd+Vp) @ (Vd+Vp, 2D) -> [x_d | x_p] in one matmul.
    emb = jnp.zeros((Vd + Vp, 2 * D), jnp.float32)
    emb = emb.at[:Vd, :D].set(emb_d)
    emb = emb.at[Vd:, D:].set(emb_p)

    # Stacked input-to-hidden weight: rows 0:D act on x_d, rows D:2D on x_p.
    wih = jnp.zeros((2 * D, 6 * HP), jnp.float32)
    whh = jnp.zeros((2 * HP, 6 * HP), jnp.float32)
    bi = jnp.zeros((1, 6 * HP), jnp.float32)
    bhn = jnp.zeros((1, 2 * HP), jnp.float32)

    for g in range(3):                 # gate order r, z, n; columns = [gate][d | p]
        c_d = g * 2 * HP
        c_p = g * 2 * HP + HP
        wih = wih.at[:D, c_d:c_d + H].set(gd["wih"][g])
        wih = wih.at[D:, c_p:c_p + H].set(gp["wih"][g])
        whh = whh.at[0:H, c_d:c_d + H].set(gd["whh"][g])
        whh = whh.at[HP:HP + H, c_p:c_p + H].set(gp["whh"][g])
        if g < 2:                      # r, z: hidden bias summed pre-sigmoid -> fold
            bi = bi.at[0, c_d:c_d + H].set(gd["bih"][g] + gd["bhh"][g])
            bi = bi.at[0, c_p:c_p + H].set(gp["bih"][g] + gp["bhh"][g])
        else:                          # n: bhh_n stays inside r * (...)
            bi = bi.at[0, c_d:c_d + H].set(gd["bih"][g])
            bi = bi.at[0, c_p:c_p + H].set(gp["bih"][g])
            bhn = bhn.at[0, 0:H].set(gd["bhh"][g])
            bhn = bhn.at[0, HP:HP + H].set(gp["bhh"][g])

    wl = params["wl"]                  # (2H, H): rows 0:H act on h_d, H:2H on h_p
    wl_f = jnp.zeros((2 * HP, HQ), jnp.float32)
    wl_f = wl_f.at[0:H, 0:H].set(wl[0:H])
    wl_f = wl_f.at[HP:HP + H, 0:H].set(wl[H:2 * H])
    bl_f = jnp.zeros((1, HQ), jnp.float32).at[0, 0:H].set(params["bl"])

    return dict(emb=emb, wih=wih, whh=whh, bi=bi, bhn=bhn, wl=wl_f, bl=bl_f, H=H)


def build_count_matrices(patient_record, diagnoses_count, procedure_count):
    """Row t = one-hot counts of admission t's codes, normalized -> mean via matmul."""
    T = len(patient_record)
    cnt_d = np.zeros((T, diagnoses_count), np.float32)
    cnt_p = np.zeros((T, procedure_count), np.float32)
    for t, adm in enumerate(patient_record):
        d = adm[DIAGNOSE_INDEX]
        p = adm[PROCEDURE_INDEX]
        for c in d:
            cnt_d[t, c] += 1.0 / len(d)
        for c in p:
            cnt_p[t, c] += 1.0 / len(p)
    return jnp.asarray(cnt_d), jnp.asarray(cnt_p)


def encoder_forward(patient_record, packed, diagnoses_count, procedure_count):
    cnt_d, cnt_p = build_count_matrices(patient_record, diagnoses_count, procedure_count)
    cnt = jnp.concatenate([cnt_d, cnt_p], axis=1)          # (T, Vd + Vp)
    q_pad = _encoder_pallas(cnt, packed["emb"], packed["wih"], packed["whh"],
                            packed["bi"], packed["bhn"], packed["wl"], packed["bl"])
    queries = q_pad[:, :packed["H"]]
    query = queries[-1:]
    memory_values = [adm[MEDICATION_INDEX] for adm in patient_record]
    if len(patient_record) > 1:
        memory_keys = queries[:-1]
        memory_values = memory_values[:-1]
    else:
        memory_keys = None
        memory_values = None
    return query, memory_keys, memory_values


# ----------------------------------------------------------------------------
# Pure-JAX reference (mirrors PyTorch math, unfused weights) for correctness
# ----------------------------------------------------------------------------
def encoder_reference(patient_record, params, diagnoses_count, procedure_count):
    cnt_d, cnt_p = build_count_matrices(patient_record, diagnoses_count, procedure_count)
    xd = cnt_d @ params["emb_d"]
    xp = cnt_p @ params["emb_p"]

    def run_gru(xs, g):
        H = g["whh"].shape[2]
        h = jnp.zeros((1, H), jnp.float32)
        outs = []
        for t in range(xs.shape[0]):
            x = xs[t:t + 1]
            r = jax.nn.sigmoid(x @ g["wih"][0] + g["bih"][0] + h @ g["whh"][0] + g["bhh"][0])
            z = jax.nn.sigmoid(x @ g["wih"][1] + g["bih"][1] + h @ g["whh"][1] + g["bhh"][1])
            n = jnp.tanh(x @ g["wih"][2] + g["bih"][2] + r * (h @ g["whh"][2] + g["bhh"][2]))
            h = (1.0 - z) * n + z * h
            outs.append(h)
        return jnp.concatenate(outs, axis=0)

    od = run_gru(xd, params["gru_d"])
    op = run_gru(xp, params["gru_p"])
    rep = jnp.concatenate([od, op], axis=-1)
    return jnp.maximum(rep, 0.0) @ params["wl"] + params["bl"]


if __name__ == "__main__":
    key = jax.random.PRNGKey(0)
    input_size = 16       # embedding dim D
    hidden_size = 32      # GRU hidden H
    diagnoses_count = 32  # vocab size of diagnosis codes
    procedure_count = 24  # vocab size of procedure codes

    params = init_params(key, input_size, hidden_size, diagnoses_count, procedure_count)
    packed = pack_params(params)

    # Synthetic patient record: 4 admissions, each = (diagnoses, procedures, medications)
    rng = np.random.RandomState(0)
    patient_record = []
    for _ in range(4):
        diags = rng.randint(0, diagnoses_count, size=rng.randint(2, 6)).tolist()
        procs = rng.randint(0, procedure_count, size=rng.randint(1, 4)).tolist()
        meds = rng.randint(0, 50, size=rng.randint(1, 5)).tolist()
        patient_record.append((diags, procs, meds))

    query, memory_keys, memory_values = encoder_forward(
        patient_record, packed, diagnoses_count, procedure_count)
    query = jax.block_until_ready(query)
    memory_keys = jax.block_until_ready(memory_keys)

    # Validate against pure-JAX reference of the same math.
    queries_ref = encoder_reference(patient_record, params, diagnoses_count, procedure_count)
    q_kernel = jnp.concatenate([memory_keys, query], axis=0)
    np.testing.assert_allclose(np.asarray(q_kernel), np.asarray(queries_ref),
                               rtol=1e-4, atol=1e-5)

    assert query.shape == (1, hidden_size)
    assert memory_keys.shape == (len(patient_record) - 1, hidden_size)
    assert len(memory_values) == len(patient_record) - 1
    print("KERNEL_OK")
</pallas_src>

<mosaic_0001>
module attributes {stable_mosaic.version = 11 : i64} {
  func.func @_encoder_kernel(%arg0: memref<4x56xf32, #tpu.memory_space<vmem>>, %arg1: memref<56x32xf32, #tpu.memory_space<vmem>>, %arg2: memref<32x384xf32, #tpu.memory_space<vmem>>, %arg3: memref<128x384xf32, #tpu.memory_space<vmem>>, %arg4: memref<1x384xf32, #tpu.memory_space<vmem>>, %arg5: memref<1x128xf32, #tpu.memory_space<vmem>>, %arg6: memref<128x128xf32, #tpu.memory_space<vmem>>, %arg7: memref<1x128xf32, #tpu.memory_space<vmem>>, %arg8: memref<4x128xf32, #tpu.memory_space<vmem>>, %arg9: memref<4x128xf32, #tpu.memory_space<vmem>>) attributes {dimension_semantics = [], scalar_prefetch = 0 : i64, scratch_operands = 1 : i64, tpu.core_type = #tpu.core_type<tc>} {
    %c0 = arith.constant 0 : index
    %c0_0 = arith.constant 0 : index
    %0 = vector.load %arg0[%c0, %c0_0] : memref<4x56xf32, #tpu.memory_space<vmem>>, vector<4x56xf32>
    %c0_1 = arith.constant 0 : index
    %c0_2 = arith.constant 0 : index
    %1 = vector.load %arg1[%c0_1, %c0_2] : memref<56x32xf32, #tpu.memory_space<vmem>>, vector<56x32xf32>
    %cst = arith.constant dense<0.000000e+00> : vector<4x32xf32>
    %2 = tpu.matmul %0, %1, %cst {dimension_numbers = #tpu.dot_dimension_numbers<[1], [0], [0], [1], [0, 0, 1, 1], [], []>} : vector<4x56xf32>, vector<56x32xf32>, vector<4x32xf32> -> vector<4x32xf32>
    %c0_3 = arith.constant 0 : index
    %c0_4 = arith.constant 0 : index
    %3 = vector.load %arg2[%c0_3, %c0_4] : memref<32x384xf32, #tpu.memory_space<vmem>>, vector<32x384xf32>
    %cst_5 = arith.constant dense<0.000000e+00> : vector<4x384xf32>
    %4 = tpu.matmul %2, %3, %cst_5 {dimension_numbers = #tpu.dot_dimension_numbers<[1], [0], [0], [1], [0, 0, 1, 1], [], []>} : vector<4x32xf32>, vector<32x384xf32>, vector<4x384xf32> -> vector<4x384xf32>
    %c0_6 = arith.constant 0 : index
    %c0_7 = arith.constant 0 : index
    %5 = vector.load %arg4[%c0_6, %c0_7] : memref<1x384xf32, #tpu.memory_space<vmem>>, vector<1x384xf32>
    %6 = vector.broadcast %5 : vector<1x384xf32> to vector<4x384xf32>
    %7 = arith.addf %4, %6 : vector<4x384xf32>
    %c0_8 = arith.constant 0 : index
    %c0_9 = arith.constant 0 : index
    %8 = vector.load %arg3[%c0_8, %c0_9] : memref<128x384xf32, #tpu.memory_space<vmem>>, vector<128x384xf32>
    %c0_10 = arith.constant 0 : index
    %c0_11 = arith.constant 0 : index
    %9 = vector.load %arg5[%c0_10, %c0_11] : memref<1x128xf32, #tpu.memory_space<vmem>>, vector<1x128xf32>
    %cst_12 = arith.constant 0.000000e+00 : f32
    %10 = vector.broadcast %cst_12 : f32 to vector<1x128xf32>
    %11 = vector.extract_strided_slice %7 {offsets = [0, 0], sizes = [1, 384], strides = [1, 1]} : vector<4x384xf32> to vector<1x384xf32>
    %cst_13 = arith.constant dense<0.000000e+00> : vector<1x384xf32>
    %12 = tpu.matmul %10, %8, %cst_13 {dimension_numbers = #tpu.dot_dimension_numbers<[1], [0], [0], [1], [0, 0, 1, 1], [], []>} : vector<1x128xf32>, vector<128x384xf32>, vector<1x384xf32> -> vector<1x384xf32>
    %13 = vector.extract_strided_slice %11 {offsets = [0, 0], sizes = [1, 128], strides = [1, 1]} : vector<1x384xf32> to vector<1x128xf32>
    %14 = vector.extract_strided_slice %12 {offsets = [0, 0], sizes = [1, 128], strides = [1, 1]} : vector<1x384xf32> to vector<1x128xf32>
    %15 = arith.addf %13, %14 : vector<1x128xf32>
    %16 = arith.negf %15 : vector<1x128xf32>
    %17 = math.exp %16 : vector<1x128xf32>
    %cst_14 = arith.constant 1.000000e+00 : f32
    %18 = vector.broadcast %cst_14 : f32 to vector<1x128xf32>
    %19 = arith.addf %18, %17 : vector<1x128xf32>
    %20 = arith.divf %18, %19 : vector<1x128xf32>
    %21 = vector.extract_strided_slice %11 {offsets = [0, 128], sizes = [1, 128], strides = [1, 1]} : vector<1x384xf32> to vector<1x128xf32>
    %22 = vector.extract_strided_slice %12 {offsets = [0, 128], sizes = [1, 128], strides = [1, 1]} : vector<1x384xf32> to vector<1x128xf32>
    %23 = arith.addf %21, %22 : vector<1x128xf32>
    %24 = arith.negf %23 : vector<1x128xf32>
    %25 = math.exp %24 : vector<1x128xf32>
    %cst_15 = arith.constant 1.000000e+00 : f32
    %26 = vector.broadcast %cst_15 : f32 to vector<1x128xf32>
    %27 = arith.addf %26, %25 : vector<1x128xf32>
    %28 = arith.divf %26, %27 : vector<1x128xf32>
    %29 = vector.extract_strided_slice %11 {offsets = [0, 256], sizes = [1, 128], strides = [1, 1]} : vector<1x384xf32> to vector<1x128xf32>
    %30 = vector.extract_strided_slice %12 {offsets = [0, 256], sizes = [1, 128], strides = [1, 1]} : vector<1x384xf32> to vector<1x128xf32>
    %31 = arith.addf %30, %9 : vector<1x128xf32>
    %32 = arith.mulf %20, %31 : vector<1x128xf32>
    %33 = arith.addf %29, %32 : vector<1x128xf32>
    %34 = math.tanh %33 : vector<1x128xf32>
    %cst_16 = arith.constant 1.000000e+00 : f32
    %35 = vector.broadcast %cst_16 : f32 to vector<1x128xf32>
    %36 = arith.subf %35, %28 : vector<1x128xf32>
    %37 = arith.mulf %36, %34 : vector<1x128xf32>
    %38 = arith.mulf %28, %10 : vector<1x128xf32>
    %39 = arith.addf %37, %38 : vector<1x128xf32>
    %c0_17 = arith.constant 0 : index
    %c0_18 = arith.constant 0 : index
    %40 = vector.load %arg9[%c0_17, %c0_18] : memref<4x128xf32, #tpu.memory_space<vmem>>, vector<1x128xf32>
    tpu.vector_store %arg9[%c0_17, %c0_18], %39 {strides = array<i32>} : memref<4x128xf32, #tpu.memory_space<vmem>>, vector<1x128xf32>,
    %41 = vector.extract_strided_slice %7 {offsets = [1, 0], sizes = [1, 384], strides = [1, 1]} : vector<4x384xf32> to vector<1x384xf32>
    %cst_19 = arith.constant dense<0.000000e+00> : vector<1x384xf32>
    %42 = tpu.matmul %39, %8, %cst_19 {dimension_numbers = #tpu.dot_dimension_numbers<[1], [0], [0], [1], [0, 0, 1, 1], [], []>} : vector<1x128xf32>, vector<128x384xf32>, vector<1x384xf32> -> vector<1x384xf32>
    %43 = vector.extract_strided_slice %41 {offsets = [0, 0], sizes = [1, 128], strides = [1, 1]} : vector<1x384xf32> to vector<1x128xf32>
    %44 = vector.extract_strided_slice %42 {offsets = [0, 0], sizes = [1, 128], strides = [1, 1]} : vector<1x384xf32> to vector<1x128xf32>
    %45 = arith.addf %43, %44 : vector<1x128xf32>
    %46 = arith.negf %45 : vector<1x128xf32>
    %47 = math.exp %46 : vector<1x128xf32>
    %cst_20 = arith.constant 1.000000e+00 : f32
    %48 = vector.broadcast %cst_20 : f32 to vector<1x128xf32>
    %49 = arith.addf %48, %47 : vector<1x128xf32>
    %50 = arith.divf %48, %49 : vector<1x128xf32>
    %51 = vector.extract_strided_slice %41 {offsets = [0, 128], sizes = [1, 128], strides = [1, 1]} : vector<1x384xf32> to vector<1x128xf32>
    %52 = vector.extract_strided_slice %42 {offsets = [0, 128], sizes = [1, 128], strides = [1, 1]} : vector<1x384xf32> to vector<1x128xf32>
    %53 = arith.addf %51, %52 : vector<1x128xf32>
    %54 = arith.negf %53 : vector<1x128xf32>
    %55 = math.exp %54 : vector<1x128xf32>
    %cst_21 = arith.constant 1.000000e+00 : f32
    %56 = vector.broadcast %cst_21 : f32 to vector<1x128xf32>
    %57 = arith.addf %56, %55 : vector<1x128xf32>
    %58 = arith.divf %56, %57 : vector<1x128xf32>
    %59 = vector.extract_strided_slice %41 {offsets = [0, 256], sizes = [1, 128], strides = [1, 1]} : vector<1x384xf32> to vector<1x128xf32>
    %60 = vector.extract_strided_slice %42 {offsets = [0, 256], sizes = [1, 128], strides = [1, 1]} : vector<1x384xf32> to vector<1x128xf32>
    %61 = arith.addf %60, %9 : vector<1x128xf32>
    %62 = arith.mulf %50, %61 : vector<1x128xf32>
    %63 = arith.addf %59, %62 : vector<1x128xf32>
    %64 = math.tanh %63 : vector<1x128xf32>
    %cst_22 = arith.constant 1.000000e+00 : f32
    %65 = vector.broadcast %cst_22 : f32 to vector<1x128xf32>
    %66 = arith.subf %65, %58 : vector<1x128xf32>
    %67 = arith.mulf %66, %64 : vector<1x128xf32>
    %68 = arith.mulf %58, %39 : vector<1x128xf32>
    %69 = arith.addf %67, %68 : vector<1x128xf32>
    %c1 = arith.constant 1 : index
    %c0_23 = arith.constant 0 : index
    %70 = vector.load %arg9[%c1, %c0_23] : memref<4x128xf32, #tpu.memory_space<vmem>>, vector<1x128xf32>
    tpu.vector_store %arg9[%c1, %c0_23], %69 {strides = array<i32>} : memref<4x128xf32, #tpu.memory_space<vmem>>, vector<1x128xf32>,
    %71 = vector.extract_strided_slice %7 {offsets = [2, 0], sizes = [1, 384], strides = [1, 1]} : vector<4x384xf32> to vector<1x384xf32>
    %cst_24 = arith.constant dense<0.000000e+00> : vector<1x384xf32>
    %72 = tpu.matmul %69, %8, %cst_24 {dimension_numbers = #tpu.dot_dimension_numbers<[1], [0], [0], [1], [0, 0, 1, 1], [], []>} : vector<1x128xf32>, vector<128x384xf32>, vector<1x384xf32> -> vector<1x384xf32>
    %73 = vector.extract_strided_slice %71 {offsets = [0, 0], sizes = [1, 128], strides = [1, 1]} : vector<1x384xf32> to vector<1x128xf32>
    %74 = vector.extract_strided_slice %72 {offsets = [0, 0], sizes = [1, 128], strides = [1, 1]} : vector<1x384xf32> to vector<1x128xf32>
    %75 = arith.addf %73, %74 : vector<1x128xf32>
    %76 = arith.negf %75 : vector<1x128xf32>
    %77 = math.exp %76 : vector<1x128xf32>
    %cst_25 = arith.constant 1.000000e+00 : f32
    %78 = vector.broadcast %cst_25 : f32 to vector<1x128xf32>
    %79 = arith.addf %78, %77 : vector<1x128xf32>
    %80 = arith.divf %78, %79 : vector<1x128xf32>
    %81 = vector.extract_strided_slice %71 {offsets = [0, 128], sizes = [1, 128], strides = [1, 1]} : vector<1x384xf32> to vector<1x128xf32>
    %82 = vector.extract_strided_slice %72 {offsets = [0, 128], sizes = [1, 128], strides = [1, 1]} : vector<1x384xf32> to vector<1x128xf32>
    %83 = arith.addf %81, %82 : vector<1x128xf32>
    %84 = arith.negf %83 : vector<1x128xf32>
    %85 = math.exp %84 : vector<1x128xf32>
    %cst_26 = arith.constant 1.000000e+00 : f32
    %86 = vector.broadcast %cst_26 : f32 to vector<1x128xf32>
    %87 = arith.addf %86, %85 : vector<1x128xf32>
    %88 = arith.divf %86, %87 : vector<1x128xf32>
    %89 = vector.extract_strided_slice %71 {offsets = [0, 256], sizes = [1, 128], strides = [1, 1]} : vector<1x384xf32> to vector<1x128xf32>
    %90 = vector.extract_strided_slice %72 {offsets = [0, 256], sizes = [1, 128], strides = [1, 1]} : vector<1x384xf32> to vector<1x128xf32>
    %91 = arith.addf %90, %9 : vector<1x128xf32>
    %92 = arith.mulf %80, %91 : vector<1x128xf32>
    %93 = arith.addf %89, %92 : vector<1x128xf32>
    %94 = math.tanh %93 : vector<1x128xf32>
    %cst_27 = arith.constant 1.000000e+00 : f32
    %95 = vector.broadcast %cst_27 : f32 to vector<1x128xf32>
    %96 = arith.subf %95, %88 : vector<1x128xf32>
    %97 = arith.mulf %96, %94 : vector<1x128xf32>
    %98 = arith.mulf %88, %69 : vector<1x128xf32>
    %99 = arith.addf %97, %98 : vector<1x128xf32>
    %c2 = arith.constant 2 : index
    %c0_28 = arith.constant 0 : index
    %100 = vector.load %arg9[%c2, %c0_28] : memref<4x128xf32, #tpu.memory_space<vmem>>, vector<1x128xf32>
    tpu.vector_store %arg9[%c2, %c0_28], %99 {strides = array<i32>} : memref<4x128xf32, #tpu.memory_space<vmem>>, vector<1x128xf32>,
    %101 = vector.extract_strided_slice %7 {offsets = [3, 0], sizes = [1, 384], strides = [1, 1]} : vector<4x384xf32> to vector<1x384xf32>
    %cst_29 = arith.constant dense<0.000000e+00> : vector<1x384xf32>
    %102 = tpu.matmul %99, %8, %cst_29 {dimension_numbers = #tpu.dot_dimension_numbers<[1], [0], [0], [1], [0, 0, 1, 1], [], []>} : vector<1x128xf32>, vector<128x384xf32>, vector<1x384xf32> -> vector<1x384xf32>
    %103 = vector.extract_strided_slice %101 {offsets = [0, 0], sizes = [1, 128], strides = [1, 1]} : vector<1x384xf32> to vector<1x128xf32>
    %104 = vector.extract_strided_slice %102 {offsets = [0, 0], sizes = [1, 128], strides = [1, 1]} : vector<1x384xf32> to vector<1x128xf32>
    %105 = arith.addf %103, %104 : vector<1x128xf32>
    %106 = arith.negf %105 : vector<1x128xf32>
    %107 = math.exp %106 : vector<1x128xf32>
    %cst_30 = arith.constant 1.000000e+00 : f32
    %108 = vector.broadcast %cst_30 : f32 to vector<1x128xf32>
    %109 = arith.addf %108, %107 : vector<1x128xf32>
    %110 = arith.divf %108, %109 : vector<1x128xf32>
    %111 = vector.extract_strided_slice %101 {offsets = [0, 128], sizes = [1, 128], strides = [1, 1]} : vector<1x384xf32> to vector<1x128xf32>
    %112 = vector.extract_strided_slice %102 {offsets = [0, 128], sizes = [1, 128], strides = [1, 1]} : vector<1x384xf32> to vector<1x128xf32>
    %113 = arith.addf %111, %112 : vector<1x128xf32>
    %114 = arith.negf %113 : vector<1x128xf32>
    %115 = math.exp %114 : vector<1x128xf32>
    %cst_31 = arith.constant 1.000000e+00 : f32
    %116 = vector.broadcast %cst_31 : f32 to vector<1x128xf32>
    %117 = arith.addf %116, %115 : vector<1x128xf32>
    %118 = arith.divf %116, %117 : vector<1x128xf32>
    %119 = vector.extract_strided_slice %101 {offsets = [0, 256], sizes = [1, 128], strides = [1, 1]} : vector<1x384xf32> to vector<1x128xf32>
    %120 = vector.extract_strided_slice %102 {offsets = [0, 256], sizes = [1, 128], strides = [1, 1]} : vector<1x384xf32> to vector<1x128xf32>
    %121 = arith.addf %120, %9 : vector<1x128xf32>
    %122 = arith.mulf %110, %121 : vector<1x128xf32>
    %123 = arith.addf %119, %122 : vector<1x128xf32>
    %124 = math.tanh %123 : vector<1x128xf32>
    %cst_32 = arith.constant 1.000000e+00 : f32
    %125 = vector.broadcast %cst_32 : f32 to vector<1x128xf32>
    %126 = arith.subf %125, %118 : vector<1x128xf32>
    %127 = arith.mulf %126, %124 : vector<1x128xf32>
    %128 = arith.mulf %118, %99 : vector<1x128xf32>
    %129 = arith.addf %127, %128 : vector<1x128xf32>
    %c3 = arith.constant 3 : index
    %c0_33 = arith.constant 0 : index
    %130 = vector.load %arg9[%c3, %c0_33] : memref<4x128xf32, #tpu.memory_space<vmem>>, vector<1x128xf32>
    tpu.vector_store %arg9[%c3, %c0_33], %129 {strides = array<i32>} : memref<4x128xf32, #tpu.memory_space<vmem>>, vector<1x128xf32>,
    %c0_34 = arith.constant 0 : index
    %c0_35 = arith.constant 0 : index
    %131 = vector.load %arg9[%c0_34, %c0_35] : memref<4x128xf32, #tpu.memory_space<vmem>>, vector<4x128xf32>
    %cst_36 = arith.constant 0.000000e+00 : f32
    %132 = vector.broadcast %cst_36 : f32 to vector<4x128xf32>
    %133 = arith.maximumf %131, %132 : vector<4x128xf32>
    %c0_37 = arith.constant 0 : index
    %c0_38 = arith.constant 0 : index
    %134 = vector.load %arg6[%c0_37, %c0_38] : memref<128x128xf32, #tpu.memory_space<vmem>>, vector<128x128xf32>
    %cst_39 = arith.constant dense<0.000000e+00> : vector<4x128xf32>
    %135 = tpu.matmul %133, %134, %cst_39 {dimension_numbers = #tpu.dot_dimension_numbers<[1], [0], [0], [1], [0, 0, 1, 1], [], []>} : vector<4x128xf32>, vector<128x128xf32>, vector<4x128xf32> -> vector<4x128xf32>
    %c0_40 = arith.constant 0 : index
    %c0_41 = arith.constant 0 : index
    %136 = vector.load %arg7[%c0_40, %c0_41] : memref<1x128xf32, #tpu.memory_space<vmem>>, vector<1x128xf32>
    %137 = vector.broadcast %136 : vector<1x128xf32> to vector<4x128xf32>
    %138 = arith.addf %135, %137 : vector<4x128xf32>
    %c0_42 = arith.constant 0 : index
    %c0_43 = arith.constant 0 : index
    %139 = vector.load %arg8[%c0_42, %c0_43] : memref<4x128xf32, #tpu.memory_space<vmem>>, vector<4x128xf32>
    tpu.vector_store %arg8[%c0_42, %c0_43], %138 {strides = array<i32>} : memref<4x128xf32, #tpu.memory_space<vmem>>, vector<4x128xf32>,
    return
  }
}

</mosaic_0001>

<llo_original>
// kernel: _encoder_pallas.1
$region0: #{_encoder_pallas.1}
  #allocation0 [shape = 'u32[]', space=smem, size = 0x4, offset = 0x4, fixed_abs, tag = 'smem constant byte address 0x4 - core index']
  #allocation1 [shape = 'u32[144,128]{1,0:T(1,128)}', space=vmem, size = 0x12000, scoped, tag = 'internal scratch']
  #allocation2 [shape = 'f32[4,128]{1,0:T(4,128)}', space=vmem, size = 0x800, scoped, tag = 'scratch operand']
  %s0 = inlined_call_operand.vmem [shape: f32[4,56], index: 0, kind: input, shape index: {}]
  %s1 = inlined_call_operand.vmem [shape: f32[56,32], index: 1, kind: input, shape index: {}]
  %s2 = inlined_call_operand.hbm [shape: f32[32,384], index: 2, kind: input, shape index: {}]
  %s3 = inlined_call_operand.hbm [shape: f32[128,384], index: 3, kind: input, shape index: {}]
  %s4 = inlined_call_operand.vmem [shape: f32[1,384], index: 4, kind: input, shape index: {}]
  %s5 = inlined_call_operand.vmem [shape: f32[1,128], index: 5, kind: input, shape index: {}]
  %s6 = inlined_call_operand.hbm [shape: f32[128,128], index: 6, kind: input, shape index: {}]
  %s7 = inlined_call_operand.vmem [shape: f32[1,128], index: 7, kind: input, shape index: {}]
  %s8 = inlined_call_operand.hbm [shape: f32[4,128], index: 8, kind: output, shape index: {}]
  %s9 = sld [smem:[#allocation0]]
  $region54: #{_encoder_pallas.1} parent=0
    _
  %s11 = ssub.s32 1, %s9
  %s12 = scalar_select 0, %s11, %s9
  $region1: #{_encoder_pallas.1} parent=0
    #allocation3 [shape = 'u8[49152]{0}', space=vmem, size = 0xc000, scoped, tag = 'input window, operand 2, single buffered']
    #allocation4 [shape = 's32[1]{0}', space=sflag, size = 0x4, scoped, tag = 'scoped memory for _encoder_pallas.1']
    #allocation5 [shape = 's32[1]{0}', space=sflag, size = 0x4, scoped, tag = 'scoped memory for _encoder_pallas.1']
    #allocation6 [shape = 'u8[196608]{0}', space=vmem, size = 0x30000, scoped, tag = 'input window, operand 3, single buffered']
    #allocation7 [shape = 's32[1]{0}', space=sflag, size = 0x4, scoped, tag = 'scoped memory for _encoder_pallas.1']
    #allocation8 [shape = 'u8[65536]{0}', space=vmem, size = 0x10000, scoped, tag = 'input window, operand 6, single buffered']
    #allocation9 [shape = 'u8[2048]{0}', space=vmem, size = 0x800, scoped, tag = 'output window, operand 0, single buffered']
    %13 = vsyncpa [#allocation4], 0
    %14 = vsyncpa [#allocation7], 0
    %15 = vsyncpa [#allocation5], 0
    // Predicated region
    $region2: #{_encoder_pallas.1} parent=1 // pred_check
      _
    $region3: #{_encoder_pallas.1} parent=1 // pred_check_branch
      %17 = sbr.rel (0) target = $region5
    $region4: #{_encoder_pallas.1} parent=1 // pred_region
      _
    $region5: #{_encoder_pallas.1} parent=1 // pred_fallthru
      _
    // Predicated region
    $region6: #{_encoder_pallas.1} parent=1 // pred_check
      _
    $region7: #{_encoder_pallas.1} parent=1 // pred_check_branch
      %19 = sbr.rel (0) target = $region9
    $region8: #{_encoder_pallas.1} parent=1 // pred_region
      _
    $region9: #{_encoder_pallas.1} parent=1 // pred_fallthru
      _
    // Predicated region
    $region10: #{_encoder_pallas.1} parent=1 // pred_check
      _
    $region11: #{_encoder_pallas.1} parent=1 // pred_check_branch
      %21 = sbr.rel (0) target = $region13
    $region12: #{_encoder_pallas.1} parent=1 // pred_region
      %s23 = ssub.s32 1536, 1536
      %24 = vsyncadd [#allocation4], %s23
      %s25 = sshll.u32 [#allocation3], 4
      %s26 = int_to_ptr.vmem [resolvable:$true] %s25
      %31 = dma.hbm_to_vmem [thread:$0]  %s2, 1536, %s26, [#allocation4], 384, 384, 24
    $region13: #{_encoder_pallas.1} parent=1 // pred_fallthru
      _
    // Predicated region
    $region14: #{_encoder_pallas.1} parent=1 // pred_check
      _
    $region15: #{_encoder_pallas.1} parent=1 // pred_check_branch
      %33 = sbr.rel (0) target = $region17
    $region16: #{_encoder_pallas.1} parent=1 // pred_region
      %s35 = ssub.s32 6144, 6144
      %36 = vsyncadd [#allocation7], %s35
      %s37 = sshll.u32 [#allocation6], 4
      %s38 = int_to_ptr.vmem [resolvable:$true] %s37
      %43 = dma.hbm_to_vmem [thread:$0]  %s3, 6144, %s38, [#allocation7], 384, 384, 24
    $region17: #{_encoder_pallas.1} parent=1 // pred_fallthru
      _
    // Predicated region
    $region18: #{_encoder_pallas.1} parent=1 // pred_check
      _
    $region19: #{_encoder_pallas.1} parent=1 // pred_check_branch
      %45 = sbr.rel (0) target = $region21
    $region20: #{_encoder_pallas.1} parent=1 // pred_region
      _
    $region21: #{_encoder_pallas.1} parent=1 // pred_fallthru
      _
    // Predicated region
    $region22: #{_encoder_pallas.1} parent=1 // pred_check
      _
    $region23: #{_encoder_pallas.1} parent=1 // pred_check_branch
      %47 = sbr.rel (0) target = $region25
    $region24: #{_encoder_pallas.1} parent=1 // pred_region
      _
    $region25: #{_encoder_pallas.1} parent=1 // pred_fallthru
      _
    // Predicated region
    $region26: #{_encoder_pallas.1} parent=1 // pred_check
      _
    $region27: #{_encoder_pallas.1} parent=1 // pred_check_branch
      %49 = sbr.rel (0) target = $region29
    $region28: #{_encoder_pallas.1} parent=1 // pred_region
      %s51 = ssub.s32 2048, 2048
      %52 = vsyncadd [#allocation7], %s51
      %s53 = sshll.u32 [#allocation8], 4
      %s54 = int_to_ptr.vmem [resolvable:$true] %s53
      %59 = dma.hbm_to_vmem [thread:$0]  %s6, 2048, %s54, [#allocation7], 128, 128, 8
    $region29: #{_encoder_pallas.1} parent=1 // pred_fallthru
      _
    // Predicated region
    $region30: #{_encoder_pallas.1} parent=1 // pred_check
      _
    $region31: #{_encoder_pallas.1} parent=1 // pred_check_branch
      %61 = sbr.rel (0) target = $region33
    $region32: #{_encoder_pallas.1} parent=1 // pred_region
      _
    $region33: #{_encoder_pallas.1} parent=1 // pred_fallthru
      _
    // Predicated region
    $region34: #{_encoder_pallas.1} parent=1 // pred_check
      _
    $region35: #{_encoder_pallas.1} parent=1 // pred_check_branch
      %63 = sbr.rel (0) target = $region37
    $region36: #{_encoder_pallas.1} parent=1 // pred_region
      %64 = dma.done [#allocation4], 1536
    $region37: #{_encoder_pallas.1} parent=1 // pred_fallthru
      _
    // Predicated region
    $region38: #{_encoder_pallas.1} parent=1 // pred_check
      _
    $region39: #{_encoder_pallas.1} parent=1 // pred_check_branch
      %66 = sbr.rel (0) target = $region41
    $region40: #{_encoder_pallas.1} parent=1 // pred_region
      %67 = dma.done [#allocation7], 6144
    $region41: #{_encoder_pallas.1} parent=1 // pred_fallthru
      _
    // Predicated region
    $region42: #{_encoder_pallas.1} parent=1 // pred_check
      _
    $region43: #{_encoder_pallas.1} parent=1 // pred_check_branch
      %69 = sbr.rel (0) target = $region45
    $region44: #{_encoder_pallas.1} parent=1 // pred_region
      %70 = dma.done [#allocation7], 2048
    $region45: #{_encoder_pallas.1} parent=1 // pred_fallthru
      _
    %v71 = vld [vmem:[%s0] sm:$0xf]
    %v72 = vld [vmem:[%s1] sm:$0xff]
    %v73 = vld [vmem:[%s1 + $0x8] sm:$0xff]
    %v74 = vld [vmem:[%s1 + $0x10] sm:$0xff]
    %v75 = vld [vmem:[%s1 + $0x18] sm:$0xff]
    %v76 = vld [vmem:[%s1 + $0x20] sm:$0xff]
    %v77 = vld [vmem:[%s1 + $0x28] sm:$0xff]
    %v78 = vld [vmem:[%s1 + $0x30] sm:$0xff]
    %vm79 = vcmask 457728
    %v81 = vsel %vm79, %v71, 0
    %83 = vmatprep.subr.mxu0 0.0
    %84 = vmatpush1.msra.mxu0 %v72
    %85 = vmatprep.subr.mxu0 0.0
    %86 = vmatpush1.msra.mxu0 %v73
    %87 = vmatprep.subr.mxu0 0.0
    %88 = vmatpush1.msra.mxu0 %v74
    %89 = vmatprep.subr.mxu0 0.0
    %90 = vmatpush1.msra.mxu0 %v75
    %91 = vmatprep.subr.mxu0 0.0
    %92 = vmatpush1.msra.mxu0 %v76
    %93 = vmatprep.subr.mxu0 0.0
    %94 = vmatpush1.msra.mxu0 %v77
    %95 = vmatprep.subr.mxu0 0.0
    %96 = vmatpush1.msra.mxu0 %v78
    %97 = vmatprep.subr.mxu0 0.0
    %98 = vmatpush1.msra.mxu0 0.0
    %99 = vmatprep.subr.mxu0 0.0
    %100 = vmatpush1.msra.mxu0 0.0
    %101 = vmatprep.subr.mxu0 0.0
    %102 = vmatpush1.msra.mxu0 0.0
    %103 = vmatprep.subr.mxu0 0.0
    %104 = vmatpush1.msra.mxu0 0.0
    %105 = vmatprep.subr.mxu0 0.0
    %106 = vmatpush1.msra.mxu0 0.0
    %107 = vmatprep.subr.mxu0 0.0
    %108 = vmatpush1.msra.mxu0 0.0
    %109 = vmatprep.subr.mxu0 0.0
    %110 = vmatpush1.msra.mxu0 0.0
    %111 = vmatprep.subr.mxu0 0.0
    %112 = vmatpush1.msra.mxu0 0.0
    %113 = vmatprep.subr.mxu0 0.0
    %114 = vmatpush1.msra.mxu0 0.0
    %115 = vmatprep.subr.mxu0 0.0
    %116 = vmatpush1.msra.mxu0 0.0
    %117 = vmatprep.subr.mxu0 0.0
    %118 = vmatpush1.msra.mxu0 0.0
    %119 = vmatprep.subr.mxu0 0.0
    %120 = vmatpush1.msra.mxu0 0.0
    %121 = vmatprep.subr.mxu0 0.0
    %122 = vmatpush1.msra.mxu0 0.0
    %123 = vmatprep.subr.mxu0 0.0
    %124 = vmatpush1.msra.mxu0 0.0
    %125 = vmatprep.subr.mxu0 0.0
    %126 = vmatpush1.msra.mxu0 0.0
    %127 = vmatprep.subr.mxu0 0.0
    %128 = vmatpush1.msra.mxu0 0.0
    %129 = vmatprep.subr.mxu0 0.0
    %130 = vmatpush1.msra.mxu0 0.0
    %131 = vmatprep.subr.mxu0 0.0
    %132 = vmatpush1.msra.mxu0 0.0
    %133 = vmatprep.subr.mxu0 0.0
    %134 = vmatpush1.msra.mxu0 0.0
    %135 = vmatprep.subr.mxu0 0.0
    %136 = vmatpush1.msra.mxu0 0.0
    %137 = vmatprep.subr.mxu0 0.0
    %138 = vmatpush1.msra.mxu0 0.0
    %139 = vmatprep.subr.mxu0 0.0
    %140 = vmatpush1.msra.mxu0 0.0
    %141 = vmatprep.subr.mxu0 0.0
    %142 = vmatpush1.msra.mxu0 0.0
    %143 = vmatprep.subr.mxu0 0.0
    %144 = vmatpush1.msra.mxu0 0.0
    %145 = vmatprep.subr.mxu0 0.0
    %146 = vmatpush1.msra.mxu0 0.0
    %147 = vmatprep.mubr.f32.mxu0 0.0
    %148 = vmatmul.mubr.f32.gmra.mrb[0].mxu0 %v81
    %v149 = vpop.f32.mrb[0].mxu0
    %v150 = vadd.f32 0.0, %v149
    %v151 = vpop.f32.mrb[0].mxu0
    %152 = vdwg.mxu0
    %v153 = vld [vmem:[#allocation3] sm:$0xff]
    %v154 = vld [vmem:[#allocation3 + $0x8] sm:$0xff]
    %v155 = vld [vmem:[#allocation3 + $0x10] sm:$0xff]
    %v156 = vld [vmem:[#allocation3 + $0x18] sm:$0xff]
    %v157 = vld [vmem:[#allocation3 + $0x20] sm:$0xff]
    %v158 = vld [vmem:[#allocation3 + $0x28] sm:$0xff]
    %v159 = vld [vmem:[#allocation3 + $0x30] sm:$0xff]
    %v160 = vld [vmem:[#allocation3 + $0x38] sm:$0xff]
    %v161 = vld [vmem:[#allocation3 + $0x40] sm:$0xff]
    %v162 = vld [vmem:[#allocation3 + $0x48] sm:$0xff]
    %v163 = vld [vmem:[#allocation3 + $0x50] sm:$0xff]
    %v164 = vld [vmem:[#allocation3 + $0x58] sm:$0xff]
    %v165 = vld [vmem:[%s4] sm:$0x7]
    %v167 = vlaneseq
    %v168 = vshrl.u32 %v167, 7
    %v169 = vsub.s32 0, %v168
    %v170 = vrot.slane %v165, %v169
    %v171 = vlaneseq
    %v172 = vshrl.u32 %v171, 7
    %v173 = vsub.s32 1, %v172
    %v174 = vrot.slane %v165, %v173
    %v175 = vlaneseq
    %v176 = vshrl.u32 %v175, 7
    %v177 = vsub.s32 2, %v176
    %v178 = vrot.slane %v165, %v177
    %vm182 = vcmask 261120
    %v184 = vsel %vm182, %v150, 0
    %186 = vmatprep.subr.mxu0 %v154
    %187 = vmatpush1.msra.mxu0 %v153
    %188 = vmatprep.subr.mxu0 %v157
    %189 = vmatpush1.msra.mxu0 %v156
    %190 = vmatprep.subr.mxu0 %v160
    %191 = vmatpush1.msra.mxu0 %v159
    %192 = vmatprep.subr.mxu0 %v163
    %193 = vmatpush1.msra.mxu0 %v162
    %194 = vmatprep.subr.mxu0 0.0
    %195 = vmatpush1.msra.mxu0 0.0
    %196 = vmatprep.subr.mxu0 0.0
    %197 = vmatpush1.msra.mxu0 0.0
    %198 = vmatprep.subr.mxu0 0.0
    %199 = vmatpush1.msra.mxu0 0.0
    %200 = vmatprep.subr.mxu0 0.0
    %201 = vmatpush1.msra.mxu0 0.0
    %202 = vmatprep.subr.mxu0 0.0
    %203 = vmatpush1.msra.mxu0 0.0
    %204 = vmatprep.subr.mxu0 0.0
    %205 = vmatpush1.msra.mxu0 0.0
    %206 = vmatprep.subr.mxu0 0.0
    %207 = vmatpush1.msra.mxu0 0.0
    %208 = vmatprep.subr.mxu0 0.0
    %209 = vmatpush1.msra.mxu0 0.0
    %210 = vmatprep.subr.mxu0 0.0
    %211 = vmatpush1.msra.mxu0 0.0
    %212 = vmatprep.subr.mxu0 0.0
    %213 = vmatpush1.msra.mxu0 0.0
    %214 = vmatprep.subr.mxu0 0.0
    %215 = vmatpush1.msra.mxu0 0.0
    %216 = vmatprep.subr.mxu0 0.0
    %217 = vmatpush1.msra.mxu0 0.0
    %218 = vmatprep.subr.mxu0 0.0
    %219 = vmatpush1.msra.mxu0 0.0
    %220 = vmatprep.subr.mxu0 0.0
    %221 = vmatpush1.msra.mxu0 0.0
    %222 = vmatprep.subr.mxu0 0.0
    %223 = vmatpush1.msra.mxu0 0.0
    %224 = vmatprep.subr.mxu0 0.0
    %225 = vmatpush1.msra.mxu0 0.0
    %226 = vmatprep.subr.mxu0 0.0
    %227 = vmatpush1.msra.mxu0 0.0
    %228 = vmatprep.subr.mxu0 0.0
    %229 = vmatpush1.msra.mxu0 0.0
    %230 = vmatprep.subr.mxu0 0.0
    %231 = vmatpush1.msra.mxu0 0.0
    %232 = vmatprep.subr.mxu0 0.0
    %233 = vmatpush1.msra.mxu0 0.0
    %234 = vmatprep.subr.mxu0 0.0
    %235 = vmatpush1.msra.mxu0 0.0
    %236 = vmatprep.subr.mxu0 0.0
    %237 = vmatpush1.msra.mxu0 0.0
    %238 = vmatprep.subr.mxu0 0.0
    %239 = vmatpush1.msra.mxu0 0.0
    %240 = vmatprep.subr.mxu0 0.0
    %241 = vmatpush1.msra.mxu0 0.0
    %242 = vmatprep.subr.mxu0 0.0
    %243 = vmatpush1.msra.mxu0 0.0
    %244 = vmatprep.subr.mxu0 0.0
    %245 = vmatpush1.msra.mxu0 0.0
    %246 = vmatprep.subr.mxu0 0.0
    %247 = vmatpush1.msra.mxu0 0.0
    %248 = vmatprep.subr.mxu0 0.0
    %249 = vmatpush1.msra.mxu0 0.0
    %250 = vmatprep.mubr.f32.mxu0 0.0
    %251 = vmatmul.mubr.f32.gmra.mrb[0].mxu0 %v184
    %v252 = vpop.f32.mrb[0].mxu0
    %v253 = vadd.f32 %v170, %v252
    %v254 = vpop.f32.mrb[0].mxu0
    %v255 = vadd.f32 %v174, %v254
    %256 = vdwg.mxu0
    %257 = vmatprep.subr.mxu0 0.0
    %258 = vmatpush1.msra.mxu0 %v155
    %259 = vmatprep.subr.mxu0 0.0
    %260 = vmatpush1.msra.mxu0 %v158
    %261 = vmatprep.subr.mxu0 0.0
    %262 = vmatpush1.msra.mxu0 %v161
    %263 = vmatprep.subr.mxu0 0.0
    %264 = vmatpush1.msra.mxu0 %v164
    %265 = vmatprep.subr.mxu0 0.0
    %266 = vmatpush1.msra.mxu0 0.0
    %267 = vmatprep.subr.mxu0 0.0
    %268 = vmatpush1.msra.mxu0 0.0
    %269 = vmatprep.subr.mxu0 0.0
    %270 = vmatpush1.msra.mxu0 0.0
    %271 = vmatprep.subr.mxu0 0.0
    %272 = vmatpush1.msra.mxu0 0.0
    %273 = vmatprep.subr.mxu0 0.0
    %274 = vmatpush1.msra.mxu0 0.0
    %275 = vmatprep.subr.mxu0 0.0
    %276 = vmatpush1.msra.mxu0 0.0
    %277 = vmatprep.subr.mxu0 0.0
    %278 = vmatpush1.msra.mxu0 0.0
    %279 = vmatprep.subr.mxu0 0.0
    %280 = vmatpush1.msra.mxu0 0.0
    %281 = vmatprep.subr.mxu0 0.0
    %282 = vmatpush1.msra.mxu0 0.0
    %283 = vmatprep.subr.mxu0 0.0
    %284 = vmatpush1.msra.mxu0 0.0
    %285 = vmatprep.subr.mxu0 0.0
    %286 = vmatpush1.msra.mxu0 0.0
    %287 = vmatprep.subr.mxu0 0.0
    %288 = vmatpush1.msra.mxu0 0.0
    %289 = vmatprep.subr.mxu0 0.0
    %290 = vmatpush1.msra.mxu0 0.0
    %291 = vmatprep.subr.mxu0 0.0
    %292 = vmatpush1.msra.mxu0 0.0
    %293 = vmatprep.subr.mxu0 0.0
    %294 = vmatpush1.msra.mxu0 0.0
    %295 = vmatprep.subr.mxu0 0.0
    %296 = vmatpush1.msra.mxu0 0.0
    %297 = vmatprep.subr.mxu0 0.0
    %298 = vmatpush1.msra.mxu0 0.0
    %299 = vmatprep.subr.mxu0 0.0
    %300 = vmatpush1.msra.mxu0 0.0
    %301 = vmatprep.subr.mxu0 0.0
    %302 = vmatpush1.msra.mxu0 0.0
    %303 = vmatprep.subr.mxu0 0.0
    %304 = vmatpush1.msra.mxu0 0.0
    %305 = vmatprep.subr.mxu0 0.0
    %306 = vmatpush1.msra.mxu0 0.0
    %307 = vmatprep.subr.mxu0 0.0
    %308 = vmatpush1.msra.mxu0 0.0
    %309 = vmatprep.subr.mxu0 0.0
    %310 = vmatpush1.msra.mxu0 0.0
    %311 = vmatprep.subr.mxu0 0.0
    %312 = vmatpush1.msra.mxu0 0.0
    %313 = vmatprep.subr.mxu0 0.0
    %314 = vmatpush1.msra.mxu0 0.0
    %315 = vmatprep.subr.mxu0 0.0
    %316 = vmatpush1.msra.mxu0 0.0
    %317 = vmatprep.subr.mxu0 0.0
    %318 = vmatpush1.msra.mxu0 0.0
    %319 = vmatprep.subr.mxu0 0.0
    %320 = vmatpush1.msra.mxu0 0.0
    %321 = vmatprep.mubr.f32.mxu0 0.0
    %322 = vmatmul.mubr.f32.gmra.mrb[0].mxu0 %v184
    %v323 = vpop.f32.mrb[0].mxu0
    %v324 = vadd.f32 %v178, %v323
    %v325 = vpop.f32.mrb[0].mxu0
    %326 = vdwg.mxu0
    %v327 = vld [vmem:[#allocation6] sm:$0xff]
    %v328 = vld [vmem:[#allocation6 + $0x8] sm:$0xff]
    %v329 = vld [vmem:[#allocation6 + $0x10] sm:$0xff]
    %v330 = vld [vmem:[#allocation6 + $0x18] sm:$0xff]
    %v331 = vld [vmem:[#allocation6 + $0x20] sm:$0xff]
    %v332 = vld [vmem:[#allocation6 + $0x28] sm:$0xff]
    %v333 = vld [vmem:[#allocation6 + $0x30] sm:$0xff]
    %v334 = vld [vmem:[#allocation6 + $0x38] sm:$0xff]
    %v335 = vld [vmem:[#allocation6 + $0x40] sm:$0xff]
    %v336 = vld [vmem:[#allocation6 + $0x48] sm:$0xff]
    %v337 = vld [vmem:[#allocation6 + $0x50] sm:$0xff]
    %v338 = vld [vmem:[#allocation6 + $0x58] sm:$0xff]
    %v339 = vld [vmem:[#allocation6 + $0x60] sm:$0xff]
    %v340 = vld [vmem:[#allocation6 + $0x68] sm:$0xff]
    %v341 = vld [vmem:[#allocation6 + $0x70] sm:$0xff]
    %v342 = vld [vmem:[#allocation6 + $0x78] sm:$0xff]
    %v343 = vld [vmem:[#allocation6 + $0x80] sm:$0xff]
    %v344 = vld [vmem:[#allocation6 + $0x88] sm:$0xff]
    %v345 = vld [vmem:[#allocation6 + $0x90] sm:$0xff]
    %v346 = vld [vmem:[#allocation6 + $0x98] sm:$0xff]
    %v347 = vld [vmem:[#allocation6 + $0xa0] sm:$0xff]
    %v348 = vld [vmem:[#allocation6 + $0xa8] sm:$0xff]
    %v349 = vld [vmem:[#allocation6 + $0xb0] sm:$0xff]
    %v350 = vld [vmem:[#allocation6 + $0xb8] sm:$0xff]
    %v351 = vld [vmem:[#allocation6 + $0xc0] sm:$0xff]
    %v352 = vld [vmem:[#allocation6 + $0xc8] sm:$0xff]
    %v353 = vld [vmem:[#allocation6 + $0xd0] sm:$0xff]
    %v354 = vld [vmem:[#allocation6 + $0xd8] sm:$0xff]
    %v355 = vld [vmem:[#allocation6 + $0xe0] sm:$0xff]
    %v356 = vld [vmem:[#allocation6 + $0xe8] sm:$0xff]
    %v357 = vld [vmem:[#allocation6 + $0xf0] sm:$0xff]
    %v358 = vld [vmem:[#allocation6 + $0xf8] sm:$0xff]
    %v359 = vld [vmem:[#allocation6 + $0x100] sm:$0xff]
    %v360 = vld [vmem:[#allocation6 + $0x108] sm:$0xff]
    %v361 = vld [vmem:[#allocation6 + $0x110] sm:$0xff]
    %v362 = vld [vmem:[#allocation6 + $0x118] sm:$0xff]
    %v363 = vld [vmem:[#allocation6 + $0x120] sm:$0xff]
    %v364 = vld [vmem:[#allocation6 + $0x128] sm:$0xff]
    %v365 = vld [vmem:[#allocation6 + $0x130] sm:$0xff]
    %v366 = vld [vmem:[#allocation6 + $0x138] sm:$0xff]
    %v367 = vld [vmem:[#allocation6 + $0x140] sm:$0xff]
    %v368 = vld [vmem:[#allocation6 + $0x148] sm:$0xff]
    %v369 = vld [vmem:[#allocation6 + $0x150] sm:$0xff]
    %v370 = vld [vmem:[#allocation6 + $0x158] sm:$0xff]
    %v371 = vld [vmem:[#allocation6 + $0x160] sm:$0xff]
    %v372 = vld [vmem:[#allocation6 + $0x168] sm:$0xff]
    %v373 = vld [vmem:[#allocation6 + $0x170] sm:$0xff]
    %v374 = vld [vmem:[#allocation6 + $0x178] sm:$0xff]
    %v375 = vld [vmem:[%s5] sm:$0x1]
    %376 = vmatprep.subr.mxu0 %v328
    %377 = vmatpush1.msra.mxu0 %v327
    %378 = vmatprep.subr.mxu0 %v331
    %379 = vmatpush1.msra.mxu0 %v330
    %380 = vmatprep.subr.mxu0 %v334
    %381 = vmatpush1.msra.mxu0 %v333
    %382 = vmatprep.subr.mxu0 %v337
    %383 = vmatpush1.msra.mxu0 %v336
    %384 = vmatprep.subr.mxu0 %v340
    %385 = vmatpush1.msra.mxu0 %v339
    %386 = vmatprep.subr.mxu0 %v343
    %387 = vmatpush1.msra.mxu0 %v342
    %388 = vmatprep.subr.mxu0 %v346
    %389 = vmatpush1.msra.mxu0 %v345
    %390 = vmatprep.subr.mxu0 %v349
    %391 = vmatpush1.msra.mxu0 %v348
    %392 = vmatprep.subr.mxu0 %v352
    %393 = vmatpush1.msra.mxu0 %v351
    %394 = vmatprep.subr.mxu0 %v355
    %395 = vmatpush1.msra.mxu0 %v354
    %396 = vmatprep.subr.mxu0 %v358
    %397 = vmatpush1.msra.mxu0 %v357
    %398 = vmatprep.subr.mxu0 %v361
    %399 = vmatpush1.msra.mxu0 %v360
    %400 = vmatprep.subr.mxu0 %v364
    %401 = vmatpush1.msra.mxu0 %v363
    %402 = vmatprep.subr.mxu0 %v367
    %403 = vmatpush1.msra.mxu0 %v366
    %404 = vmatprep.subr.mxu0 %v370
    %405 = vmatpush1.msra.mxu0 %v369
    %406 = vmatprep.subr.mxu0 %v373
    %407 = vmatpush1.msra.mxu0 %v372
    %408 = vmatprep.subr.mxu0 0.0
    %409 = vmatpush1.msra.mxu0 0.0
    %410 = vmatprep.subr.mxu0 0.0
    %411 = vmatpush1.msra.mxu0 0.0
    %412 = vmatprep.subr.mxu0 0.0
    %413 = vmatpush1.msra.mxu0 0.0
    %414 = vmatprep.subr.mxu0 0.0
    %415 = vmatpush1.msra.mxu0 0.0
    %416 = vmatprep.subr.mxu0 0.0
    %417 = vmatpush1.msra.mxu0 0.0
    %418 = vmatprep.subr.mxu0 0.0
    %419 = vmatpush1.msra.mxu0 0.0
    %420 = vmatprep.subr.mxu0 0.0
    %421 = vmatpush1.msra.mxu0 0.0
    %422 = vmatprep.subr.mxu0 0.0
    %423 = vmatpush1.msra.mxu0 0.0
    %424 = vmatprep.subr.mxu0 0.0
    %425 = vmatpush1.msra.mxu0 0.0
    %426 = vmatprep.subr.mxu0 0.0
    %427 = vmatpush1.msra.mxu0 0.0
    %428 = vmatprep.subr.mxu0 0.0
    %429 = vmatpush1.msra.mxu0 0.0
    %430 = vmatprep.subr.mxu0 0.0
    %431 = vmatpush1.msra.mxu0 0.0
    %432 = vmatprep.subr.mxu0 0.0
    %433 = vmatpush1.msra.mxu0 0.0
    %434 = vmatprep.subr.mxu0 0.0
    %435 = vmatpush1.msra.mxu0 0.0
    %436 = vmatprep.subr.mxu0 0.0
    %437 = vmatpush1.msra.mxu0 0.0
    %438 = vmatprep.subr.mxu0 0.0
    %439 = vmatpush1.msra.mxu0 0.0
    %440 = vmatprep.mubr.f32.mxu0 0.0
    %441 = vmatmul.mubr.f32.gmra.mrb[0].mxu0 0.0
    %v442 = vpop.f32.mrb[0].mxu0
    %v443 = vadd.f32 0.0, %v442
    %v444 = vpop.f32.mrb[0].mxu0
    %v445 = vadd.f32 0.0, %v444
    %446 = vdwg.mxu0
    %447 = vmatprep.subr.mxu0 0.0
    %448 = vmatpush1.msra.mxu0 %v329
    %449 = vmatprep.subr.mxu0 0.0
    %450 = vmatpush1.msra.mxu0 %v332
    %451 = vmatprep.subr.mxu0 0.0
    %452 = vmatpush1.msra.mxu0 %v335
    %453 = vmatprep.subr.mxu0 0.0
    %454 = vmatpush1.msra.mxu0 %v338
    %455 = vmatprep.subr.mxu0 0.0
    %456 = vmatpush1.msra.mxu0 %v341
    %457 = vmatprep.subr.mxu0 0.0
    %458 = vmatpush1.msra.mxu0 %v344
    %459 = vmatprep.subr.mxu0 0.0
    %460 = vmatpush1.msra.mxu0 %v347
    %461 = vmatprep.subr.mxu0 0.0
    %462 = vmatpush1.msra.mxu0 %v350
    %463 = vmatprep.subr.mxu0 0.0
    %464 = vmatpush1.msra.mxu0 %v353
    %465 = vmatprep.subr.mxu0 0.0
    %466 = vmatpush1.msra.mxu0 %v356
    %467 = vmatprep.subr.mxu0 0.0
    %468 = vmatpush1.msra.mxu0 %v359
    %469 = vmatprep.subr.mxu0 0.0
    %470 = vmatpush1.msra.mxu0 %v362
    %471 = vmatprep.subr.mxu0 0.0
    %472 = vmatpush1.msra.mxu0 %v365
    %473 = vmatprep.subr.mxu0 0.0
    %474 = vmatpush1.msra.mxu0 %v368
    %475 = vmatprep.subr.mxu0 0.0
    %476 = vmatpush1.msra.mxu0 %v371
    %477 = vmatprep.subr.mxu0 0.0
    %478 = vmatpush1.msra.mxu0 %v374
    %479 = vmatprep.subr.mxu0 0.0
    %480 = vmatpush1.msra.mxu0 0.0
    %481 = vmatprep.subr.mxu0 0.0
    %482 = vmatpush1.msra.mxu0 0.0
    %483 = vmatprep.subr.mxu0 0.0
    %484 = vmatpush1.msra.mxu0 0.0
    %485 = vmatprep.subr.mxu0 0.0
    %486 = vmatpush1.msra.mxu0 0.0
    %487 = vmatprep.subr.mxu0 0.0
    %488 = vmatpush1.msra.mxu0 0.0
    %489 = vmatprep.subr.mxu0 0.0
    %490 = vmatpush1.msra.mxu0 0.0
    %491 = vmatprep.subr.mxu0 0.0
    %492 = vmatpush1.msra.mxu0 0.0
    %493 = vmatprep.subr.mxu0 0.0
    %494 = vmatpush1.msra.mxu0 0.0
    %495 = vmatprep.subr.mxu0 0.0
    %496 = vmatpush1.msra.mxu0 0.0
    %497 = vmatprep.subr.mxu0 0.0
    %498 = vmatpush1.msra.mxu0 0.0
    %499 = vmatprep.subr.mxu0 0.0
    %500 = vmatpush1.msra.mxu0 0.0
    %501 = vmatprep.subr.mxu0 0.0
    %502 = vmatpush1.msra.mxu0 0.0
    %503 = vmatprep.subr.mxu0 0.0
    %504 = vmatpush1.msra.mxu0 0.0
    %505 = vmatprep.subr.mxu0 0.0
    %506 = vmatpush1.msra.mxu0 0.0
    %507 = vmatprep.subr.mxu0 0.0
    %508 = vmatpush1.msra.mxu0 0.0
    %509 = vmatprep.subr.mxu0 0.0
    %510 = vmatpush1.msra.mxu0 0.0
    %511 = vmatprep.mubr.f32.mxu0 0.0
    %512 = vmatmul.mubr.f32.gmra.mrb[0].mxu0 0.0
    %v513 = vpop.f32.mrb[0].mxu0
    %v514 = vadd.f32 0.0, %v513
    %v515 = vpop.f32.mrb[0].mxu0
    %516 = vdwg.mxu0
    %v517 = vadd.f32 %v253, %v443
    %v518 = vxor.u32 %v517, 2147483648
    %v519 = vmul.f32 %v518, 1.442695
    %v520 = vpow.pop %v519
    %v521 = vadd.f32 %v520, 1.0
    %v522 = vrcp.pop %v521
    %v523 = vmul.f32 1.0, %v522
    %v524 = vadd.f32 %v255, %v445
    %v525 = vxor.u32 %v524, 2147483648
    %v526 = vmul.f32 %v525, 1.442695
    %v527 = vpow.pop %v526
    %v528 = vadd.f32 %v527, 1.0
    %v529 = vrcp.pop %v528
    %v530 = vmul.f32 1.0, %v529
    %v531 = vadd.f32 %v514, %v375
    %v532 = vmul.f32 %v523, %v531
    %v533 = vadd.f32 %v324, %v532
    %v534 = vtanh.pop %v533
    %v535 = vsub.f32 1.0, %v530
    %v536 = vmul.f32 %v535, %v534
    %v537 = vmul.f32 %v530, 0.0
    %v538 = vadd.f32 %v536, %v537
    %539 = vst [vmem:[#allocation2] sm:$0x1] %v538
    %540 = vmatprep.subr.mxu0 %v328
    %541 = vmatpush1.msra.mxu0 %v327
    %542 = vmatprep.subr.mxu0 %v331
    %543 = vmatpush1.msra.mxu0 %v330
    %544 = vmatprep.subr.mxu0 %v334
    %545 = vmatpush1.msra.mxu0 %v333
    %546 = vmatprep.subr.mxu0 %v337
    %547 = vmatpush1.msra.mxu0 %v336
    %548 = vmatprep.subr.mxu0 %v340
    %549 = vmatpush1.msra.mxu0 %v339
    %550 = vmatprep.subr.mxu0 %v343
    %551 = vmatpush1.msra.mxu0 %v342
    %552 = vmatprep.subr.mxu0 %v346
    %553 = vmatpush1.msra.mxu0 %v345
    %554 = vmatprep.subr.mxu0 %v349
    %555 = vmatpush1.msra.mxu0 %v348
    %556 = vmatprep.subr.mxu0 %v352
    %557 = vmatpush1.msra.mxu0 %v351
    %558 = vmatprep.subr.mxu0 %v355
    %559 = vmatpush1.msra.mxu0 %v354
    %560 = vmatprep.subr.mxu0 %v358
    %561 = vmatpush1.msra.mxu0 %v357
    %562 = vmatprep.subr.mxu0 %v361
    %563 = vmatpush1.msra.mxu0 %v360
    %564 = vmatprep.subr.mxu0 %v364
    %565 = vmatpush1.msra.mxu0 %v363
    %566 = vmatprep.subr.mxu0 %v367
    %567 = vmatpush1.msra.mxu0 %v366
    %568 = vmatprep.subr.mxu0 %v370
    %569 = vmatpush1.msra.mxu0 %v369
    %570 = vmatprep.subr.mxu0 %v373
    %571 = vmatpush1.msra.mxu0 %v372
    %572 = vmatprep.subr.mxu0 0.0
    %573 = vmatpush1.msra.mxu0 0.0
    %574 = vmatprep.subr.mxu0 0.0
    %575 = vmatpush1.msra.mxu0 0.0
    %576 = vmatprep.subr.mxu0 0.0
    %577 = vmatpush1.msra.mxu0 0.0
    %578 = vmatprep.subr.mxu0 0.0
    %579 = vmatpush1.msra.mxu0 0.0
    %580 = vmatprep.subr.mxu0 0.0
    %581 = vmatpush1.msra.mxu0 0.0
    %582 = vmatprep.subr.mxu0 0.0
    %583 = vmatpush1.msra.mxu0 0.0
    %584 = vmatprep.subr.mxu0 0.0
    %585 = vmatpush1.msra.mxu0 0.0
    %586 = vmatprep.subr.mxu0 0.0
    %587 = vmatpush1.msra.mxu0 0.0
    %588 = vmatprep.subr.mxu0 0.0
    %589 = vmatpush1.msra.mxu0 0.0
    %590 = vmatprep.subr.mxu0 0.0
    %591 = vmatpush1.msra.mxu0 0.0
    %592 = vmatprep.subr.mxu0 0.0
    %593 = vmatpush1.msra.mxu0 0.0
    %594 = vmatprep.subr.mxu0 0.0
    %595 = vmatpush1.msra.mxu0 0.0
    %596 = vmatprep.subr.mxu0 0.0
    %597 = vmatpush1.msra.mxu0 0.0
    %598 = vmatprep.subr.mxu0 0.0
    %599 = vmatpush1.msra.mxu0 0.0
    %600 = vmatprep.subr.mxu0 0.0
    %601 = vmatpush1.msra.mxu0 0.0
    %602 = vmatprep.subr.mxu0 0.0
    %603 = vmatpush1.msra.mxu0 0.0
    %604 = vmatprep.mubr.f32.mxu0 0.0
    %605 = vmatmul.mubr.f32.gmra.mrb[0].mxu0 %v538
    %v606 = vpop.f32.mrb[0].mxu0
    %v607 = vadd.f32 0.0, %v606
    %v608 = vpop.f32.mrb[0].mxu0
    %v609 = vadd.f32 0.0, %v608
    %610 = vdwg.mxu0
    %611 = vmatprep.subr.mxu0 0.0
    %612 = vmatpush1.msra.mxu0 %v329
    %613 = vmatprep.subr.mxu0 0.0
    %614 = vmatpush1.msra.mxu0 %v332
    %615 = vmatprep.subr.mxu0 0.0
    %616 = vmatpush1.msra.mxu0 %v335
    %617 = vmatprep.subr.mxu0 0.0
    %618 = vmatpush1.msra.mxu0 %v338
    %619 = vmatprep.subr.mxu0 0.0
    %620 = vmatpush1.msra.mxu0 %v341
    %621 = vmatprep.subr.mxu0 0.0
    %622 = vmatpush1.msra.mxu0 %v344
    %623 = vmatprep.subr.mxu0 0.0
    %624 = vmatpush1.msra.mxu0 %v347
    %625 = vmatprep.subr.mxu0 0.0
    %626 = vmatpush1.msra.mxu0 %v350
    %627 = vmatprep.subr.mxu0 0.0
    %628 = vmatpush1.msra.mxu0 %v353
    %629 = vmatprep.subr.mxu0 0.0
    %630 = vmatpush1.msra.mxu0 %v356
    %631 = vmatprep.subr.mxu0 0.0
    %632 = vmatpush1.msra.mxu0 %v359
    %633 = vmatprep.subr.mxu0 0.0
    %634 = vmatpush1.msra.mxu0 %v362
    %635 = vmatprep.subr.mxu0 0.0
    %636 = vmatpush1.msra.mxu0 %v365
    %637 = vmatprep.subr.mxu0 0.0
    %638 = vmatpush1.msra.mxu0 %v368
    %639 = vmatprep.subr.mxu0 0.0
    %640 = vmatpush1.msra.mxu0 %v371
    %641 = vmatprep.subr.mxu0 0.0
    %642 = vmatpush1.msra.mxu0 %v374
    %643 = vmatprep.subr.mxu0 0.0
    %644 = vmatpush1.msra.mxu0 0.0
    %645 = vmatprep.subr.mxu0 0.0
    %646 = vmatpush1.msra.mxu0 0.0
    %647 = vmatprep.subr.mxu0 0.0
    %648 = vmatpush1.msra.mxu0 0.0
    %649 = vmatprep.subr.mxu0 0.0
    %650 = vmatpush1.msra.mxu0 0.0
    %651 = vmatprep.subr.mxu0 0.0
    %652 = vmatpush1.msra.mxu0 0.0
    %653 = vmatprep.subr.mxu0 0.0
    %654 = vmatpush1.msra.mxu0 0.0
    %655 = vmatprep.subr.mxu0 0.0
    %656 = vmatpush1.msra.mxu0 0.0
    %657 = vmatprep.subr.mxu0 0.0
    %658 = vmatpush1.msra.mxu0 0.0
    %659 = vmatprep.subr.mxu0 0.0
    %660 = vmatpush1.msra.mxu0 0.0
    %661 = vmatprep.subr.mxu0 0.0
    %662 = vmatpush1.msra.mxu0 0.0
    %663 = vmatprep.subr.mxu0 0.0
    %664 = vmatpush1.msra.mxu0 0.0
    %665 = vmatprep.subr.mxu0 0.0
    %666 = vmatpush1.msra.mxu0 0.0
    %667 = vmatprep.subr.mxu0 0.0
    %668 = vmatpush1.msra.mxu0 0.0
    %669 = vmatprep.subr.mxu0 0.0
    %670 = vmatpush1.msra.mxu0 0.0
    %671 = vmatprep.subr.mxu0 0.0
    %672 = vmatpush1.msra.mxu0 0.0
    %673 = vmatprep.subr.mxu0 0.0
    %674 = vmatpush1.msra.mxu0 0.0
    %675 = vmatprep.mubr.f32.mxu0 0.0
    %676 = vmatmul.mubr.f32.gmra.mrb[0].mxu0 %v538
    %v677 = vpop.f32.mrb[0].mxu0
    %v678 = vadd.f32 0.0, %v677
    %v679 = vpop.f32.mrb[0].mxu0
    %680 = vdwg.mxu0
    %v682 = vrot.slane %v607, 7
    %v684 = vadd.f32 %v253, %v682
    %v685 = vxor.u32 %v684, 2147483648
    %v686 = vmul.f32 %v685, 1.442695
    %v687 = vpow.pop %v686
    %v688 = vadd.f32 %v687, 1.0
    %v689 = vrcp.pop %v688
    %v690 = vmul.f32 1.0, %v689
    %v692 = vrot.slane %v609, 7
    %v694 = vadd.f32 %v255, %v692
    %v695 = vxor.u32 %v694, 2147483648
    %v696 = vmul.f32 %v695, 1.442695
    %v697 = vpow.pop %v696
    %v698 = vadd.f32 %v697, 1.0
    %v699 = vrcp.pop %v698
    %v700 = vmul.f32 1.0, %v699
    %v701 = vadd.f32 %v678, %v375
    %v703 = vrot.slane %v701, 7
    %v705 = vmul.f32 %v690, %v703
    %v706 = vadd.f32 %v324, %v705
    %v707 = vtanh.pop %v706
    %v708 = vsub.f32 1.0, %v700
    %v709 = vmul.f32 %v708, %v707
    %v711 = vrot.slane %v538, 7
    %v713 = vmul.f32 %v700, %v711
    %v714 = vadd.f32 %v709, %v713
    %715 = vst [vmem:[#allocation2] sm:$0x2] %v714
    %v717 = vrot.slane %v714, 1
    %719 = vmatprep.subr.mxu0 %v328
    %720 = vmatpush1.msra.mxu0 %v327
    %721 = vmatprep.subr.mxu0 %v331
    %722 = vmatpush1.msra.mxu0 %v330
    %723 = vmatprep.subr.mxu0 %v334
    %724 = vmatpush1.msra.mxu0 %v333
    %725 = vmatprep.subr.mxu0 %v337
    %726 = vmatpush1.msra.mxu0 %v336
    %727 = vmatprep.subr.mxu0 %v340
    %728 = vmatpush1.msra.mxu0 %v339
    %729 = vmatprep.subr.mxu0 %v343
    %730 = vmatpush1.msra.mxu0 %v342
    %731 = vmatprep.subr.mxu0 %v346
    %732 = vmatpush1.msra.mxu0 %v345
    %733 = vmatprep.subr.mxu0 %v349
    %734 = vmatpush1.msra.mxu0 %v348
    %735 = vmatprep.subr.mxu0 %v352
    %736 = vmatpush1.msra.mxu0 %v351
    %737 = vmatprep.subr.mxu0 %v355
    %738 = vmatpush1.msra.mxu0 %v354
    %739 = vmatprep.subr.mxu0 %v358
    %740 = vmatpush1.msra.mxu0 %v357
    %741 = vmatprep.subr.mxu0 %v361
    %742 = vmatpush1.msra.mxu0 %v360
    %743 = vmatprep.subr.mxu0 %v364
    %744 = vmatpush1.msra.mxu0 %v363
    %745 = vmatprep.subr.mxu0 %v367
    %746 = vmatpush1.msra.mxu0 %v366
    %747 = vmatprep.subr.mxu0 %v370
    %748 = vmatpush1.msra.mxu0 %v369
    %749 = vmatprep.subr.mxu0 %v373
    %750 = vmatpush1.msra.mxu0 %v372
    %751 = vmatprep.subr.mxu0 0.0
    %752 = vmatpush1.msra.mxu0 0.0
    %753 = vmatprep.subr.mxu0 0.0
    %754 = vmatpush1.msra.mxu0 0.0
    %755 = vmatprep.subr.mxu0 0.0
    %756 = vmatpush1.msra.mxu0 0.0
    %757 = vmatprep.subr.mxu0 0.0
    %758 = vmatpush1.msra.mxu0 0.0
    %759 = vmatprep.subr.mxu0 0.0
    %760 = vmatpush1.msra.mxu0 0.0
    %761 = vmatprep.subr.mxu0 0.0
    %762 = vmatpush1.msra.mxu0 0.0
    %763 = vmatprep.subr.mxu0 0.0
    %764 = vmatpush1.msra.mxu0 0.0
    %765 = vmatprep.subr.mxu0 0.0
    %766 = vmatpush1.msra.mxu0 0.0
    %767 = vmatprep.subr.mxu0 0.0
    %768 = vmatpush1.msra.mxu0 0.0
    %769 = vmatprep.subr.mxu0 0.0
    %770 = vmatpush1.msra.mxu0 0.0
    %771 = vmatprep.subr.mxu0 0.0
    %772 = vmatpush1.msra.mxu0 0.0
    %773 = vmatprep.subr.mxu0 0.0
    %774 = vmatpush1.msra.mxu0 0.0
    %775 = vmatprep.subr.mxu0 0.0
    %776 = vmatpush1.msra.mxu0 0.0
    %777 = vmatprep.subr.mxu0 0.0
    %778 = vmatpush1.msra.mxu0 0.0
    %779 = vmatprep.subr.mxu0 0.0
    %780 = vmatpush1.msra.mxu0 0.0
    %781 = vmatprep.subr.mxu0 0.0
    %782 = vmatpush1.msra.mxu0 0.0
    %783 = vmatprep.mubr.f32.mxu0 0.0
    %784 = vmatmul.mubr.f32.gmra.mrb[0].mxu0 %v717
    %v785 = vpop.f32.mrb[0].mxu0
    %v786 = vadd.f32 0.0, %v785
    %v787 = vpop.f32.mrb[0].mxu0
    %v788 = vadd.f32 0.0, %v787
    %789 = vdwg.mxu0
    %790 = vmatprep.subr.mxu0 0.0
    %791 = vmatpush1.msra.mxu0 %v329
    %792 = vmatprep.subr.mxu0 0.0
    %793 = vmatpush1.msra.mxu0 %v332
    %794 = vmatprep.subr.mxu0 0.0
    %795 = vmatpush1.msra.mxu0 %v335
    %796 = vmatprep.subr.mxu0 0.0
    %797 = vmatpush1.msra.mxu0 %v338
    %798 = vmatprep.subr.mxu0 0.0
    %799 = vmatpush1.msra.mxu0 %v341
    %800 = vmatprep.subr.mxu0 0.0
    %801 = vmatpush1.msra.mxu0 %v344
    %802 = vmatprep.subr.mxu0 0.0
    %803 = vmatpush1.msra.mxu0 %v347
    %804 = vmatprep.subr.mxu0 0.0
    %805 = vmatpush1.msra.mxu0 %v350
    %806 = vmatprep.subr.mxu0 0.0
    %807 = vmatpush1.msra.mxu0 %v353
    %808 = vmatprep.subr.mxu0 0.0
    %809 = vmatpush1.msra.mxu0 %v356
    %810 = vmatprep.subr.mxu0 0.0
    %811 = vmatpush1.msra.mxu0 %v359
    %812 = vmatprep.subr.mxu0 0.0
    %813 = vmatpush1.msra.mxu0 %v362
    %814 = vmatprep.subr.mxu0 0.0
    %815 = vmatpush1.msra.mxu0 %v365
    %816 = vmatprep.subr.mxu0 0.0
    %817 = vmatpush1.msra.mxu0 %v368
    %818 = vmatprep.subr.mxu0 0.0
    %819 = vmatpush1.msra.mxu0 %v371
    %820 = vmatprep.subr.mxu0 0.0
    %821 = vmatpush1.msra.mxu0 %v374
    %822 = vmatprep.subr.mxu0 0.0
    %823 = vmatpush1.msra.mxu0 0.0
    %824 = vmatprep.subr.mxu0 0.0
    %825 = vmatpush1.msra.mxu0 0.0
    %826 = vmatprep.subr.mxu0 0.0
    %827 = vmatpush1.msra.mxu0 0.0
    %828 = vmatprep.subr.mxu0 0.0
    %829 = vmatpush1.msra.mxu0 0.0
    %830 = vmatprep.subr.mxu0 0.0
    %831 = vmatpush1.msra.mxu0 0.0
    %832 = vmatprep.subr.mxu0 0.0
    %833 = vmatpush1.msra.mxu0 0.0
    %834 = vmatprep.subr.mxu0 0.0
    %835 = vmatpush1.msra.mxu0 0.0
    %836 = vmatprep.subr.mxu0 0.0
    %837 = vmatpush1.msra.mxu0 0.0
    %838 = vmatprep.subr.mxu0 0.0
    %839 = vmatpush1.msra.mxu0 0.0
    %840 = vmatprep.subr.mxu0 0.0
    %841 = vmatpush1.msra.mxu0 0.0
    %842 = vmatprep.subr.mxu0 0.0
    %843 = vmatpush1.msra.mxu0 0.0
    %844 = vmatprep.subr.mxu0 0.0
    %845 = vmatpush1.msra.mxu0 0.0
    %846 = vmatprep.subr.mxu0 0.0
    %847 = vmatpush1.msra.mxu0 0.0
    %848 = vmatprep.subr.mxu0 0.0
    %849 = vmatpush1.msra.mxu0 0.0
    %850 = vmatprep.subr.mxu0 0.0
    %851 = vmatpush1.msra.mxu0 0.0
    %852 = vmatprep.subr.mxu0 0.0
    %853 = vmatpush1.msra.mxu0 0.0
    %854 = vmatprep.mubr.f32.mxu0 0.0
    %855 = vmatmul.mubr.f32.gmra.mrb[0].mxu0 %v717
    %v856 = vpop.f32.mrb[0].mxu0
    %v857 = vadd.f32 0.0, %v856
    %v858 = vpop.f32.mrb[0].mxu0
    %859 = vdwg.mxu0
    %v861 = vrot.slane %v786, 6
    %v863 = vadd.f32 %v253, %v861
    %v864 = vxor.u32 %v863, 2147483648
    %v865 = vmul.f32 %v864, 1.442695
    %v866 = vpow.pop %v865
    %v867 = vadd.f32 %v866, 1.0
    %v868 = vrcp.pop %v867
    %v869 = vmul.f32 1.0, %v868
    %v871 = vrot.slane %v788, 6
    %v873 = vadd.f32 %v255, %v871
    %v874 = vxor.u32 %v873, 2147483648
    %v875 = vmul.f32 %v874, 1.442695
    %v876 = vpow.pop %v875
    %v877 = vadd.f32 %v876, 1.0
    %v878 = vrcp.pop %v877
    %v879 = vmul.f32 1.0, %v878
    %v880 = vadd.f32 %v857, %v375
    %v882 = vrot.slane %v880, 6
    %v884 = vmul.f32 %v869, %v882
    %v885 = vadd.f32 %v324, %v884
    %v886 = vtanh.pop %v885
    %v887 = vsub.f32 1.0, %v879
    %v888 = vmul.f32 %v887, %v886
    %v889 = vrot.slane %v714, 7
    %v891 = vmul.f32 %v879, %v889
    %v892 = vadd.f32 %v888, %v891
    %893 = vst [vmem:[#allocation2] sm:$0x4] %v892
    %v895 = vrot.slane %v892, 2
    %897 = vmatprep.subr.mxu0 %v328
    %898 = vmatpush1.msra.mxu0 %v327
    %899 = vmatprep.subr.mxu0 %v331
    %900 = vmatpush1.msra.mxu0 %v330
    %901 = vmatprep.subr.mxu0 %v334
    %902 = vmatpush1.msra.mxu0 %v333
    %903 = vmatprep.subr.mxu0 %v337
    %904 = vmatpush1.msra.mxu0 %v336
    %905 = vmatprep.subr.mxu0 %v340
    %906 = vmatpush1.msra.mxu0 %v339
    %907 = vmatprep.subr.mxu0 %v343
    %908 = vmatpush1.msra.mxu0 %v342
    %909 = vmatprep.subr.mxu0 %v346
    %910 = vmatpush1.msra.mxu0 %v345
    %911 = vmatprep.subr.mxu0 %v349
    %912 = vmatpush1.msra.mxu0 %v348
    %913 = vmatprep.subr.mxu0 %v352
    %914 = vmatpush1.msra.mxu0 %v351
    %915 = vmatprep.subr.mxu0 %v355
    %916 = vmatpush1.msra.mxu0 %v354
    %917 = vmatprep.subr.mxu0 %v358
    %918 = vmatpush1.msra.mxu0 %v357
    %919 = vmatprep.subr.mxu0 %v361
    %920 = vmatpush1.msra.mxu0 %v360
    %921 = vmatprep.subr.mxu0 %v364
    %922 = vmatpush1.msra.mxu0 %v363
    %923 = vmatprep.subr.mxu0 %v367
    %924 = vmatpush1.msra.mxu0 %v366
    %925 = vmatprep.subr.mxu0 %v370
    %926 = vmatpush1.msra.mxu0 %v369
    %927 = vmatprep.subr.mxu0 %v373
    %928 = vmatpush1.msra.mxu0 %v372
    %929 = vmatprep.subr.mxu0 0.0
    %930 = vmatpush1.msra.mxu0 0.0
    %931 = vmatprep.subr.mxu0 0.0
    %932 = vmatpush1.msra.mxu0 0.0
    %933 = vmatprep.subr.mxu0 0.0
    %934 = vmatpush1.msra.mxu0 0.0
    %935 = vmatprep.subr.mxu0 0.0
    %936 = vmatpush1.msra.mxu0 0.0
    %937 = vmatprep.subr.mxu0 0.0
    %938 = vmatpush1.msra.mxu0 0.0
    %939 = vmatprep.subr.mxu0 0.0
    %940 = vmatpush1.msra.mxu0 0.0
    %941 = vmatprep.subr.mxu0 0.0
    %942 = vmatpush1.msra.mxu0 0.0
    %943 = vmatprep.subr.mxu0 0.0
    %944 = vmatpush1.msra.mxu0 0.0
    %945 = vmatprep.subr.mxu0 0.0
    %946 = vmatpush1.msra.mxu0 0.0
    %947 = vmatprep.subr.mxu0 0.0
    %948 = vmatpush1.msra.mxu0 0.0
    %949 = vmatprep.subr.mxu0 0.0
    %950 = vmatpush1.msra.mxu0 0.0
    %951 = vmatprep.subr.mxu0 0.0
    %952 = vmatpush1.msra.mxu0 0.0
    %953 = vmatprep.subr.mxu0 0.0
    %954 = vmatpush1.msra.mxu0 0.0
    %955 = vmatprep.subr.mxu0 0.0
    %956 = vmatpush1.msra.mxu0 0.0
    %957 = vmatprep.subr.mxu0 0.0
    %958 = vmatpush1.msra.mxu0 0.0
    %959 = vmatprep.subr.mxu0 0.0
    %960 = vmatpush1.msra.mxu0 0.0
    %961 = vmatprep.mubr.f32.mxu0 0.0
    %962 = vmatmul.mubr.f32.gmra.mrb[0].mxu0 %v895
    %v963 = vpop.f32.mrb[0].mxu0
    %v964 = vadd.f32 0.0, %v963
    %v965 = vpop.f32.mrb[0].mxu0
    %v966 = vadd.f32 0.0, %v965
    %967 = vdwg.mxu0
    %968 = vmatprep.subr.mxu0 0.0
    %969 = vmatpush1.msra.mxu0 %v329
    %970 = vmatprep.subr.mxu0 0.0
    %971 = vmatpush1.msra.mxu0 %v332
    %972 = vmatprep.subr.mxu0 0.0
    %973 = vmatpush1.msra.mxu0 %v335
    %974 = vmatprep.subr.mxu0 0.0
    %975 = vmatpush1.msra.mxu0 %v338
    %976 = vmatprep.subr.mxu0 0.0
    %977 = vmatpush1.msra.mxu0 %v341
    %978 = vmatprep.subr.mxu0 0.0
    %979 = vmatpush1.msra.mxu0 %v344
    %980 = vmatprep.subr.mxu0 0.0
    %981 = vmatpush1.msra.mxu0 %v347
    %982 = vmatprep.subr.mxu0 0.0
    %983 = vmatpush1.msra.mxu0 %v350
    %984 = vmatprep.subr.mxu0 0.0
    %985 = vmatpush1.msra.mxu0 %v353
    %986 = vmatprep.subr.mxu0 0.0
    %987 = vmatpush1.msra.mxu0 %v356
    %988 = vmatprep.subr.mxu0 0.0
    %989 = vmatpush1.msra.mxu0 %v359
    %990 = vmatprep.subr.mxu0 0.0
    %991 = vmatpush1.msra.mxu0 %v362
    %992 = vmatprep.subr.mxu0 0.0
    %993 = vmatpush1.msra.mxu0 %v365
    %994 = vmatprep.subr.mxu0 0.0
    %995 = vmatpush1.msra.mxu0 %v368
    %996 = vmatprep.subr.mxu0 0.0
    %997 = vmatpush1.msra.mxu0 %v371
    %998 = vmatprep.subr.mxu0 0.0
    %999 = vmatpush1.msra.mxu0 %v374
    %1000 = vmatprep.subr.mxu0 0.0
    %1001 = vmatpush1.msra.mxu0 0.0
    %1002 = vmatprep.subr.mxu0 0.0
    %1003 = vmatpush1.msra.mxu0 0.0
    %1004 = vmatprep.subr.mxu0 0.0
    %1005 = vmatpush1.msra.mxu0 0.0
    %1006 = vmatprep.subr.mxu0 0.0
    %1007 = vmatpush1.msra.mxu0 0.0
    %1008 = vmatprep.subr.mxu0 0.0
    %1009 = vmatpush1.msra.mxu0 0.0
    %1010 = vmatprep.subr.mxu0 0.0
    %1011 = vmatpush1.msra.mxu0 0.0
    %1012 = vmatprep.subr.mxu0 0.0
    %1013 = vmatpush1.msra.mxu0 0.0
    %1014 = vmatprep.subr.mxu0 0.0
    %1015 = vmatpush1.msra.mxu0 0.0
    %1016 = vmatprep.subr.mxu0 0.0
    %1017 = vmatpush1.msra.mxu0 0.0
    %1018 = vmatprep.subr.mxu0 0.0
    %1019 = vmatpush1.msra.mxu0 0.0
    %1020 = vmatprep.subr.mxu0 0.0
    %1021 = vmatpush1.msra.mxu0 0.0
    %1022 = vmatprep.subr.mxu0 0.0
    %1023 = vmatpush1.msra.mxu0 0.0
    %1024 = vmatprep.subr.mxu0 0.0
    %1025 = vmatpush1.msra.mxu0 0.0
    %1026 = vmatprep.subr.mxu0 0.0
    %1027 = vmatpush1.msra.mxu0 0.0
    %1028 = vmatprep.subr.mxu0 0.0
    %1029 = vmatpush1.msra.mxu0 0.0
    %1030 = vmatprep.subr.mxu0 0.0
    %1031 = vmatpush1.msra.mxu0 0.0
    %1032 = vmatprep.mubr.f32.mxu0 0.0
    %1033 = vmatmul.mubr.f32.gmra.mrb[0].mxu0 %v895
    %v1034 = vpop.f32.mrb[0].mxu0
    %v1035 = vadd.f32 0.0, %v1034
    %v1036 = vpop.f32.mrb[0].mxu0
    %1037 = vdwg.mxu0
    %v1039 = vrot.slane %v964, 5
    %v1041 = vadd.f32 %v253, %v1039
    %v1042 = vxor.u32 %v1041, 2147483648
    %v1043 = vmul.f32 %v1042, 1.442695
    %v1044 = vpow.pop %v1043
    %v1045 = vadd.f32 %v1044, 1.0
    %v1046 = vrcp.pop %v1045
    %v1047 = vmul.f32 1.0, %v1046
    %v1049 = vrot.slane %v966, 5
    %v1051 = vadd.f32 %v255, %v1049
    %v1052 = vxor.u32 %v1051, 2147483648
    %v1053 = vmul.f32 %v1052, 1.442695
    %v1054 = vpow.pop %v1053
    %v1055 = vadd.f32 %v1054, 1.0
    %v1056 = vrcp.pop %v1055
    %v1057 = vmul.f32 1.0, %v1056
    %v1058 = vadd.f32 %v1035, %v375
    %v1060 = vrot.slane %v1058, 5
    %v1062 = vmul.f32 %v1047, %v1060
    %v1063 = vadd.f32 %v324, %v1062
    %v1064 = vtanh.pop %v1063
    %v1065 = vsub.f32 1.0, %v1057
    %v1066 = vmul.f32 %v1065, %v1064
    %v1067 = vrot.slane %v892, 7
    %v1069 = vmul.f32 %v1057, %v1067
    %v1070 = vadd.f32 %v1066, %v1069
    %1071 = vst [vmem:[#allocation2] sm:$0x8] %v1070
    %v1072 = vld [vmem:[#allocation2] sm:$0xf]
    %v1073 = vmax.f32 %v1072, 0.0
    %v1074 = vld [vmem:[#allocation8] sm:$0xff]
    %v1075 = vld [vmem:[#allocation8 + $0x8] sm:$0xff]
    %v1076 = vld [vmem:[#allocation8 + $0x10] sm:$0xff]
    %v1077 = vld [vmem:[#allocation8 + $0x18] sm:$0xff]
    %v1078 = vld [vmem:[#allocation8 + $0x20] sm:$0xff]
    %v1079 = vld [vmem:[#allocation8 + $0x28] sm:$0xff]
    %v1080 = vld [vmem:[#allocation8 + $0x30] sm:$0xff]
    %v1081 = vld [vmem:[#allocation8 + $0x38] sm:$0xff]
    %v1082 = vld [vmem:[#allocation8 + $0x40] sm:$0xff]
    %v1083 = vld [vmem:[#allocation8 + $0x48] sm:$0xff]
    %v1084 = vld [vmem:[#allocation8 + $0x50] sm:$0xff]
    %v1085 = vld [vmem:[#allocation8 + $0x58] sm:$0xff]
    %v1086 = vld [vmem:[#allocation8 + $0x60] sm:$0xff]
    %v1087 = vld [vmem:[#allocation8 + $0x68] sm:$0xff]
    %v1088 = vld [vmem:[#allocation8 + $0x70] sm:$0xff]
    %v1089 = vld [vmem:[#allocation8 + $0x78] sm:$0xff]
    %v1090 = vld [vmem:[%s7] sm:$0x1]
    %v1092 = vlaneseq
    %v1093 = vshrl.u32 %v1092, 7
    %v1094 = vsub.s32 0, %v1093
    %v1095 = vrot.slane %v1090, %v1094
    %1097 = vmatprep.subr.mxu0 0.0
    %1098 = vmatpush1.msra.mxu0 %v1074
    %1099 = vmatprep.subr.mxu0 0.0
    %1100 = vmatpush1.msra.mxu0 %v1075
    %1101 = vmatprep.subr.mxu0 0.0
    %1102 = vmatpush1.msra.mxu0 %v1076
    %1103 = vmatprep.subr.mxu0 0.0
    %1104 = vmatpush1.msra.mxu0 %v1077
    %1105 = vmatprep.subr.mxu0 0.0
    %1106 = vmatpush1.msra.mxu0 %v1078
    %1107 = vmatprep.subr.mxu0 0.0
    %1108 = vmatpush1.msra.mxu0 %v1079
    %1109 = vmatprep.subr.mxu0 0.0
    %1110 = vmatpush1.msra.mxu0 %v1080
    %1111 = vmatprep.subr.mxu0 0.0
    %1112 = vmatpush1.msra.mxu0 %v1081
    %1113 = vmatprep.subr.mxu0 0.0
    %1114 = vmatpush1.msra.mxu0 %v1082
    %1115 = vmatprep.subr.mxu0 0.0
    %1116 = vmatpush1.msra.mxu0 %v1083
    %1117 = vmatprep.subr.mxu0 0.0
    %1118 = vmatpush1.msra.mxu0 %v1084
    %1119 = vmatprep.subr.mxu0 0.0
    %1120 = vmatpush1.msra.mxu0 %v1085
    %1121 = vmatprep.subr.mxu0 0.0
    %1122 = vmatpush1.msra.mxu0 %v1086
    %1123 = vmatprep.subr.mxu0 0.0
    %1124 = vmatpush1.msra.mxu0 %v1087
    %1125 = vmatprep.subr.mxu0 0.0
    %1126 = vmatpush1.msra.mxu0 %v1088
    %1127 = vmatprep.subr.mxu0 0.0
    %1128 = vmatpush1.msra.mxu0 %v1089
    %1129 = vmatprep.subr.mxu0 0.0
    %1130 = vmatpush1.msra.mxu0 0.0
    %1131 = vmatprep.subr.mxu0 0.0
    %1132 = vmatpush1.msra.mxu0 0.0
    %1133 = vmatprep.subr.mxu0 0.0
    %1134 = vmatpush1.msra.mxu0 0.0
    %1135 = vmatprep.subr.mxu0 0.0
    %1136 = vmatpush1.msra.mxu0 0.0
    %1137 = vmatprep.subr.mxu0 0.0
    %1138 = vmatpush1.msra.mxu0 0.0
    %1139 = vmatprep.subr.mxu0 0.0
    %1140 = vmatpush1.msra.mxu0 0.0
    %1141 = vmatprep.subr.mxu0 0.0
    %1142 = vmatpush1.msra.mxu0 0.0
    %1143 = vmatprep.subr.mxu0 0.0
    %1144 = vmatpush1.msra.mxu0 0.0
    %1145 = vmatprep.subr.mxu0 0.0
    %1146 = vmatpush1.msra.mxu0 0.0
    %1147 = vmatprep.subr.mxu0 0.0
    %1148 = vmatpush1.msra.mxu0 0.0
    %1149 = vmatprep.subr.mxu0 0.0
    %1150 = vmatpush1.msra.mxu0 0.0
    %1151 = vmatprep.subr.mxu0 0.0
    %1152 = vmatpush1.msra.mxu0 0.0
    %1153 = vmatprep.subr.mxu0 0.0
    %1154 = vmatpush1.msra.mxu0 0.0
    %1155 = vmatprep.subr.mxu0 0.0
    %1156 = vmatpush1.msra.mxu0 0.0
    %1157 = vmatprep.subr.mxu0 0.0
    %1158 = vmatpush1.msra.mxu0 0.0
    %1159 = vmatprep.subr.mxu0 0.0
    %1160 = vmatpush1.msra.mxu0 0.0
    %1161 = vmatprep.mubr.f32.mxu0 0.0
    %1162 = vmatmul.mubr.f32.gmra.mrb[0].mxu0 %v1073
    %v1163 = vpop.f32.mrb[0].mxu0
    %v1164 = vadd.f32 %v1095, %v1163
    %v1165 = vpop.f32.mrb[0].mxu0
    %1166 = vdwg.mxu0
    %1167 = vst [vmem:[#allocation9] sm:$0xf] %v1164
    // Predicated region
    $region46: #{_encoder_pallas.1} parent=1 // pred_check
      _
    $region47: #{_encoder_pallas.1} parent=1 // pred_check_branch
      %1169 = sbr.rel (0) target = $region49
    $region48: #{_encoder_pallas.1} parent=1 // pred_region
      %s1171 = ssub.s32 64, 64
      %1172 = vsyncadd [#allocation5], %s1171
      %s1174 = sshll.u32 [#allocation9], 4
      %s1175 = int_to_ptr.vmem [resolvable:$true] %s1174
      %1177 = dma.vmem_to_hbm [thread:$0]  %s1175, 64, %s8, [#allocation5]
    $region49: #{_encoder_pallas.1} parent=1 // pred_fallthru
      _
    // Predicated region
    $region50: #{_encoder_pallas.1} parent=1 // pred_check
      _
    $region51: #{_encoder_pallas.1} parent=1 // pred_check_branch
      %1179 = sbr.rel (0) target = $region53
    $region52: #{_encoder_pallas.1} parent=1 // pred_region
      %1180 = dma.done [#allocation5], 64
    $region53: #{_encoder_pallas.1} parent=1 // pred_fallthru
      _
    %1181 = vsyncpa [#allocation4], 1
    %1182 = vsyncpa [#allocation7], 1
    %1183 = vsyncpa [#allocation5], 1

</llo_original>
